<compile_context>
chip_gen: v7x
topology: tpu7x:2x2x1
jax: 0.10.0
libtpu: 0.0.40
codegen_flags: <defaults>
</compile_context>

<pallas_src>
import functools

import jax
import jax.numpy as jnp
import numpy as np
from jax import lax
from jax.experimental import pallas as pl
from jax.experimental.pallas import tpu as pltpu

EPS = 1e-12


def _lstm_cell(gates, c, H):
    """gates: (rows, 4H) in order (i, f, o, g); c: (rows, H)."""
    H3 = 3 * H
    sig = jax.nn.sigmoid(gates[:, :H3])        # i, f, o in one contiguous EUP slab
    g_g = jnp.tanh(gates[:, H3:])              # g
    i_g = sig[:, :H]
    f_g = sig[:, H:2 * H]
    o_g = sig[:, 2 * H:H3]
    c_new = f_g * c + i_g * g_g
    h_new = o_g * jnp.tanh(c_new)
    return h_new, c_new


def intra_chunk_rnn_kernel(x_ref, wih_ref, whh_ref, b_ref,
                           wfc_ref, bfc_ref, gamma_ref, beta_ref,
                           out_ref, *scratch,
                           K, S, F, H, keep_in_regs, mxdt):
    """One batch element per grid step.

    x_ref     : (1, K*S, F) time-major rows (k major, s minor); also the residual
    wih_ref   : (F, 4H)  pre-transposed LSTM input weights, gate order (i, f, o, g)
    whh_ref   : (H, 4H)  pre-transposed LSTM hidden weights, same gate order
    b_ref     : (1, 4H)  combined bias b_ih + b_hh, reordered
    wfc_ref   : (H, F)   pre-transposed fc weight; bfc_ref: (1, F) fc bias
    gamma/beta: (1, F)   GroupNorm(1, F) affine params
    out_ref   : (1, K*S, F)
    scratch   : () if keep_in_regs else (gx_ref (K*S,4H), hseq_ref (K*S,H))
    """
    KS = K * S

    def mm(a, b):
        return jnp.dot(a.astype(mxdt), b.astype(mxdt),
                       preferred_element_type=jnp.float32)

    x2d = x_ref[0]                                    # (K*S, F) — no reshape needed
    whh = whh_ref[...]                                # (H, 4H)

    # ---- hoisted input projection: one MXU matmul over all K*S rows ----
    gx = mm(x2d, wih_ref[...]) + b_ref[...]           # (K*S, 4H) f32

    h = jnp.zeros((S, H), jnp.float32)
    c = jnp.zeros((S, H), jnp.float32)

    if keep_in_regs:
        # [item 9] small K*S: pre-gates stay in vregs, fully unrolled, static slices.
        hs = []
        for t in range(K):
            gates = gx[t * S:(t + 1) * S, :] + mm(h, whh)
            h, c = _lstm_cell(gates, c, H)
            hs.append(h)
        hseq = jnp.concatenate(hs, axis=0)            # (K*S, H)
    else:
        # Production-sized K*S: stash pre-gates / hidden states in flat VMEM scratch.
        gx_ref, hseq_ref = scratch
        gx_ref[...] = gx

        def step(t, carry):
            h_t, c_t = carry
            r = pl.multiple_of(t * S, S)
            gates = gx_ref[pl.ds(r, S), :] + mm(h_t, whh)
            h_t, c_t = _lstm_cell(gates, c_t, H)
            hseq_ref[pl.ds(r, S), :] = h_t
            return h_t, c_t

        lax.fori_loop(0, K, step, (h, c), unroll=min(K, 8))   # [item 8]
        hseq = hseq_ref[...]

    # ---- fc: single (K*S, H) @ (H, F) matmul + bias ----
    y = mm(hseq, wfc_ref[...]) + bfc_ref[...]         # (K*S, F)

    # ---- GlobalLayerNorm == GroupNorm(1, F): per-batch stats, one pass, clamped ----
    cnt = jnp.float32(KS * F)
    mean = jnp.sum(y) / cnt
    var = jnp.maximum(jnp.sum(y * y) / cnt - mean * mean, 0.0)
    inv = lax.rsqrt(var + EPS)
    y = (y - mean) * inv * gamma_ref[...] + beta_ref[...]

    out_ref[0] = y + x2d                              # residual add, lane-dense store


@functools.partial(jax.jit, static_argnames=("matmul_dtype",))
def intra_chunk_rnn(x, params, *, matmul_dtype=jnp.float32):
    """x: (B, F, S, K) float32 -> (B, F, S, K) float32."""
    B, F, S, K = x.shape
    H = params["w_hh"].shape[1]
    H4 = 4 * H
    KS = K * S

    # One fused HBM transpose to the time-major, (K,S)-flattened layout. The inverse
    # is applied on the way out. (See TODO(synk) at the top re: item 3.)
    x_tm = jnp.transpose(x, (0, 3, 2, 1)).reshape(B, KS, F)

    # Reorder torch gate rows (i, f, g, o) -> (i, f, o, g) and pre-transpose so the
    # kernel has no in-kernel transposes and sigmoid hits one contiguous slab.
    def reorder_rows(w):
        return jnp.concatenate([w[:2 * H], w[3 * H:], w[2 * H:3 * H]], axis=0)

    wih_t = reorder_rows(params["w_ih"]).T            # (F, 4H)
    whh_t = reorder_rows(params["w_hh"]).T            # (H, 4H)
    b = params["b"]                                   # (1, 4H) = b_ih + b_hh
    bias_r = jnp.concatenate(
        [b[:, :2 * H], b[:, 3 * H:], b[:, 2 * H:3 * H]], axis=1)
    wfc_t = params["w_fc"].T                          # (H, F)

    # [item 9] keep pre-gates register-resident when they are only a few vregs.
    keep_in_regs = (KS * H4 <= 16 * 1024) and (K <= 32)

    kernel = functools.partial(
        intra_chunk_rnn_kernel, K=K, S=S, F=F, H=H,
        keep_in_regs=keep_in_regs, mxdt=matmul_dtype)

    scratch_shapes = [] if keep_in_regs else [
        pltpu.VMEM((KS, H4), jnp.float32),            # pre-gates  [item 1: flat]
        pltpu.VMEM((KS, H), jnp.float32),             # hidden sequence
    ]

    c2 = lambda b_idx: (0, 0)
    grid_spec = pltpu.PrefetchScalarGridSpec(
        num_scalar_prefetch=0,
        grid=(B,),
        in_specs=[
            pl.BlockSpec((1, KS, F), lambda b_idx: (b_idx, 0, 0)),   # x (flattened)
            pl.BlockSpec((F, H4), c2),                               # w_ih^T
            pl.BlockSpec((H, H4), c2),                               # w_hh^T
            pl.BlockSpec((1, H4), c2),                               # bias
            pl.BlockSpec((H, F), c2),                                # w_fc^T
            pl.BlockSpec((1, F), c2),                                # b_fc
            pl.BlockSpec((1, F), c2),                                # gamma
            pl.BlockSpec((1, F), c2),                                # beta
        ],
        out_specs=pl.BlockSpec((1, KS, F), lambda b_idx: (b_idx, 0, 0)),
        scratch_shapes=scratch_shapes,
    )

    # [item 6] request only what we need (+ headroom), never the whole VMEM.
    block_bytes = KS * F * 4
    weight_bytes = 4 * (F * H4 + H * H4 + H4 + H * F + 3 * F)
    scratch_bytes = 0 if keep_in_regs else 4 * (KS * H4 + KS * H)
    need = 2 * 2 * block_bytes + 2 * weight_bytes + scratch_bytes
    vmem_limit = int(min(max(8 << 20, 2 * need), 48 << 20))

    out = pl.pallas_call(
        kernel,
        out_shape=jax.ShapeDtypeStruct((B, KS, F), jnp.float32),
        grid_spec=grid_spec,
        input_output_aliases={0: 0},   # residual input buffer becomes the output
        compiler_params=pltpu.CompilerParams(
            dimension_semantics=("parallel",),        # [item 5] >=2 steps -> 2 TCs
            vmem_limit_bytes=vmem_limit),
    )(x_tm, wih_t, whh_t, bias_r, wfc_t,
      params["b_fc"], params["gamma"], params["beta"])

    return jnp.transpose(out.reshape(B, K, S, F), (0, 3, 2, 1))


def reference(x, params):
    """Pure-JAX re-implementation of the PyTorch forward for validation."""
    B, F, S, K = x.shape
    N = B * S
    H = params["w_hh"].shape[1]
    wih, whh, b = params["w_ih"], params["w_hh"], params["b"][0]

    xs = jnp.transpose(x, (0, 2, 3, 1)).reshape(N, K, F)   # (N, K, F)
    xt = jnp.transpose(xs, (1, 0, 2))                      # (K, N, F)

    def step(carry, x_t):
        h, c = carry
        gates = x_t @ wih.T + h @ whh.T + b
        i = jax.nn.sigmoid(gates[:, :H])
        f = jax.nn.sigmoid(gates[:, H:2 * H])
        g = jnp.tanh(gates[:, 2 * H:3 * H])
        o = jax.nn.sigmoid(gates[:, 3 * H:])
        c = f * c + i * g
        h = o * jnp.tanh(c)
        return (h, c), h

    (_, _), hs = lax.scan(step,
                          (jnp.zeros((N, H), jnp.float32),
                           jnp.zeros((N, H), jnp.float32)), xt)
    hs = jnp.transpose(hs, (1, 0, 2))                      # (N, K, H)
    y = hs @ params["w_fc"].T + params["b_fc"][0]          # (N, K, F)
    y = jnp.transpose(y.reshape(B, S * K, F), (0, 2, 1))   # (B, F, S*K)
    mean = y.mean(axis=(1, 2), keepdims=True)
    var = y.var(axis=(1, 2), keepdims=True)                # biased, like GroupNorm
    y = (y - mean) / jnp.sqrt(var + EPS)
    y = y * params["gamma"][0][None, :, None] + params["beta"][0][None, :, None]
    return y.reshape(B, F, S, K) + x


if __name__ == "__main__":
    # batch, num_features, S (num chunks), chunk_size, hidden_channels
    # F=128 keeps every block lane-dense (typical GALR feature dims are 64-128).
    B, F, S, K, H = 2, 128, 4, 8, 32

    key = jax.random.PRNGKey(0)
    keys = jax.random.split(key, 8)
    stdv = 1.0 / np.sqrt(H)

    params = {
        "w_ih": jax.random.uniform(keys[0], (4 * H, F), jnp.float32, -stdv, stdv),
        "w_hh": jax.random.uniform(keys[1], (4 * H, H), jnp.float32, -stdv, stdv),
        "b": (jax.random.uniform(keys[2], (1, 4 * H), jnp.float32, -stdv, stdv)
              + jax.random.uniform(keys[3], (1, 4 * H), jnp.float32, -stdv, stdv)),
        "w_fc": jax.random.uniform(keys[4], (F, H), jnp.float32, -stdv, stdv),
        "b_fc": jax.random.uniform(keys[5], (1, F), jnp.float32, -stdv, stdv),
        "gamma": jnp.ones((1, F), jnp.float32),
        "beta": jnp.zeros((1, F), jnp.float32),
    }

    x = jax.random.normal(keys[6], (B, F, S, K), jnp.float32)

    out = jax.block_until_ready(intra_chunk_rnn(x, params, matmul_dtype=jnp.float32))
    ref = jax.block_until_ready(reference(x, params))

    assert out.shape == (B, F, S, K)
    np.testing.assert_allclose(np.asarray(out), np.asarray(ref),
                               rtol=1e-4, atol=1e-4)

    print("KERNEL_OK")
</pallas_src>

<mosaic_0001>
module attributes {stable_mosaic.version = 11 : i64} {
  func.func @intra_chunk_rnn_kernel(%arg0: i32, %arg1: memref<1x32x128xf32, #tpu.memory_space<vmem>>, %arg2: memref<128x128xf32, #tpu.memory_space<vmem>>, %arg3: memref<32x128xf32, #tpu.memory_space<vmem>>, %arg4: memref<1x128xf32, #tpu.memory_space<vmem>>, %arg5: memref<32x128xf32, #tpu.memory_space<vmem>>, %arg6: memref<1x128xf32, #tpu.memory_space<vmem>>, %arg7: memref<1x128xf32, #tpu.memory_space<vmem>>, %arg8: memref<1x128xf32, #tpu.memory_space<vmem>>, %arg9: memref<1x32x128xf32, #tpu.memory_space<vmem>>) attributes {dimension_semantics = [#tpu.dimension_semantics<parallel>], iteration_bounds = array<i64: 2>, scalar_prefetch = 0 : i64, scratch_operands = 0 : i64, tpu.core_type = #tpu.core_type<tc>, window_params = [{transform_indices = @transform_0, window_bounds = array<i64: 1, 32, 128>}, {pipeline_mode = #tpu.pipeline_mode<synchronous>, transform_indices = @transform_1, window_bounds = array<i64: 128, 128>}, {pipeline_mode = #tpu.pipeline_mode<synchronous>, transform_indices = @transform_2, window_bounds = array<i64: 32, 128>}, {pipeline_mode = #tpu.pipeline_mode<synchronous>, transform_indices = @transform_3, window_bounds = array<i64: 1, 128>}, {pipeline_mode = #tpu.pipeline_mode<synchronous>, transform_indices = @transform_4, window_bounds = array<i64: 32, 128>}, {pipeline_mode = #tpu.pipeline_mode<synchronous>, transform_indices = @transform_5, window_bounds = array<i64: 1, 128>}, {pipeline_mode = #tpu.pipeline_mode<synchronous>, transform_indices = @transform_6, window_bounds = array<i64: 1, 128>}, {pipeline_mode = #tpu.pipeline_mode<synchronous>, transform_indices = @transform_7, window_bounds = array<i64: 1, 128>}, {transform_indices = @transform_8, window_bounds = array<i64: 1, 32, 128>}]} {
    %c0 = arith.constant 0 : index
    %c0_0 = arith.constant 0 : index
    %c0_1 = arith.constant 0 : index
    %0 = vector.load %arg1[%c0, %c0_0, %c0_1] : memref<1x32x128xf32, #tpu.memory_space<vmem>>, vector<1x32x128xf32>
    %1 = vector.shape_cast %0 : vector<1x32x128xf32> to vector<32x128xf32>
    %c0_2 = arith.constant 0 : index
    %c0_3 = arith.constant 0 : index
    %2 = vector.load %arg3[%c0_2, %c0_3] : memref<32x128xf32, #tpu.memory_space<vmem>>, vector<32x128xf32>
    %c0_4 = arith.constant 0 : index
    %c0_5 = arith.constant 0 : index
    %3 = vector.load %arg2[%c0_4, %c0_5] : memref<128x128xf32, #tpu.memory_space<vmem>>, vector<128x128xf32>
    %cst = arith.constant dense<0.000000e+00> : vector<32x128xf32>
    %4 = tpu.matmul %1, %3, %cst {dimension_numbers = #tpu.dot_dimension_numbers<[1], [0], [0], [1], [0, 0, 1, 1], [], []>} : vector<32x128xf32>, vector<128x128xf32>, vector<32x128xf32> -> vector<32x128xf32>
    %c0_6 = arith.constant 0 : index
    %c0_7 = arith.constant 0 : index
    %5 = vector.load %arg4[%c0_6, %c0_7] : memref<1x128xf32, #tpu.memory_space<vmem>>, vector<1x128xf32>
    %6 = vector.broadcast %5 : vector<1x128xf32> to vector<32x128xf32>
    %7 = arith.addf %4, %6 : vector<32x128xf32>
    %cst_8 = arith.constant 0.000000e+00 : f32
    %8 = vector.broadcast %cst_8 : f32 to vector<4x32xf32>
    %cst_9 = arith.constant 0.000000e+00 : f32
    %9 = vector.broadcast %cst_9 : f32 to vector<4x32xf32>
    %10 = vector.extract_strided_slice %7 {offsets = [0, 0], sizes = [4, 128], strides = [1, 1]} : vector<32x128xf32> to vector<4x128xf32>
    %cst_10 = arith.constant dense<0.000000e+00> : vector<4x128xf32>
    %11 = tpu.matmul %8, %2, %cst_10 {dimension_numbers = #tpu.dot_dimension_numbers<[1], [0], [0], [1], [0, 0, 1, 1], [], []>} : vector<4x32xf32>, vector<32x128xf32>, vector<4x128xf32> -> vector<4x128xf32>
    %12 = arith.addf %10, %11 : vector<4x128xf32>
    %13 = vector.extract_strided_slice %12 {offsets = [0, 0], sizes = [4, 96], strides = [1, 1]} : vector<4x128xf32> to vector<4x96xf32>
    %14 = arith.negf %13 : vector<4x96xf32>
    %15 = math.exp %14 : vector<4x96xf32>
    %cst_11 = arith.constant 1.000000e+00 : f32
    %16 = vector.broadcast %cst_11 : f32 to vector<4x96xf32>
    %17 = arith.addf %16, %15 : vector<4x96xf32>
    %18 = arith.divf %16, %17 : vector<4x96xf32>
    %19 = vector.extract_strided_slice %12 {offsets = [0, 96], sizes = [4, 32], strides = [1, 1]} : vector<4x128xf32> to vector<4x32xf32>
    %20 = math.tanh %19 : vector<4x32xf32>
    %21 = vector.extract_strided_slice %18 {offsets = [0, 0], sizes = [4, 32], strides = [1, 1]} : vector<4x96xf32> to vector<4x32xf32>
    %22 = vector.extract_strided_slice %18 {offsets = [0, 32], sizes = [4, 32], strides = [1, 1]} : vector<4x96xf32> to vector<4x32xf32>
    %23 = vector.extract_strided_slice %18 {offsets = [0, 64], sizes = [4, 32], strides = [1, 1]} : vector<4x96xf32> to vector<4x32xf32>
    %24 = arith.mulf %22, %9 : vector<4x32xf32>
    %25 = arith.mulf %21, %20 : vector<4x32xf32>
    %26 = arith.addf %24, %25 : vector<4x32xf32>
    %27 = math.tanh %26 : vector<4x32xf32>
    %28 = arith.mulf %23, %27 : vector<4x32xf32>
    %29 = vector.extract_strided_slice %7 {offsets = [4, 0], sizes = [4, 128], strides = [1, 1]} : vector<32x128xf32> to vector<4x128xf32>
    %cst_12 = arith.constant dense<0.000000e+00> : vector<4x128xf32>
    %30 = tpu.matmul %28, %2, %cst_12 {dimension_numbers = #tpu.dot_dimension_numbers<[1], [0], [0], [1], [0, 0, 1, 1], [], []>} : vector<4x32xf32>, vector<32x128xf32>, vector<4x128xf32> -> vector<4x128xf32>
    %31 = arith.addf %29, %30 : vector<4x128xf32>
    %32 = vector.extract_strided_slice %31 {offsets = [0, 0], sizes = [4, 96], strides = [1, 1]} : vector<4x128xf32> to vector<4x96xf32>
    %33 = arith.negf %32 : vector<4x96xf32>
    %34 = math.exp %33 : vector<4x96xf32>
    %cst_13 = arith.constant 1.000000e+00 : f32
    %35 = vector.broadcast %cst_13 : f32 to vector<4x96xf32>
    %36 = arith.addf %35, %34 : vector<4x96xf32>
    %37 = arith.divf %35, %36 : vector<4x96xf32>
    %38 = vector.extract_strided_slice %31 {offsets = [0, 96], sizes = [4, 32], strides = [1, 1]} : vector<4x128xf32> to vector<4x32xf32>
    %39 = math.tanh %38 : vector<4x32xf32>
    %40 = vector.extract_strided_slice %37 {offsets = [0, 0], sizes = [4, 32], strides = [1, 1]} : vector<4x96xf32> to vector<4x32xf32>
    %41 = vector.extract_strided_slice %37 {offsets = [0, 32], sizes = [4, 32], strides = [1, 1]} : vector<4x96xf32> to vector<4x32xf32>
    %42 = vector.extract_strided_slice %37 {offsets = [0, 64], sizes = [4, 32], strides = [1, 1]} : vector<4x96xf32> to vector<4x32xf32>
    %43 = arith.mulf %41, %26 : vector<4x32xf32>
    %44 = arith.mulf %40, %39 : vector<4x32xf32>
    %45 = arith.addf %43, %44 : vector<4x32xf32>
    %46 = math.tanh %45 : vector<4x32xf32>
    %47 = arith.mulf %42, %46 : vector<4x32xf32>
    %48 = vector.extract_strided_slice %7 {offsets = [8, 0], sizes = [4, 128], strides = [1, 1]} : vector<32x128xf32> to vector<4x128xf32>
    %cst_14 = arith.constant dense<0.000000e+00> : vector<4x128xf32>
    %49 = tpu.matmul %47, %2, %cst_14 {dimension_numbers = #tpu.dot_dimension_numbers<[1], [0], [0], [1], [0, 0, 1, 1], [], []>} : vector<4x32xf32>, vector<32x128xf32>, vector<4x128xf32> -> vector<4x128xf32>
    %50 = arith.addf %48, %49 : vector<4x128xf32>
    %51 = vector.extract_strided_slice %50 {offsets = [0, 0], sizes = [4, 96], strides = [1, 1]} : vector<4x128xf32> to vector<4x96xf32>
    %52 = arith.negf %51 : vector<4x96xf32>
    %53 = math.exp %52 : vector<4x96xf32>
    %cst_15 = arith.constant 1.000000e+00 : f32
    %54 = vector.broadcast %cst_15 : f32 to vector<4x96xf32>
    %55 = arith.addf %54, %53 : vector<4x96xf32>
    %56 = arith.divf %54, %55 : vector<4x96xf32>
    %57 = vector.extract_strided_slice %50 {offsets = [0, 96], sizes = [4, 32], strides = [1, 1]} : vector<4x128xf32> to vector<4x32xf32>
    %58 = math.tanh %57 : vector<4x32xf32>
    %59 = vector.extract_strided_slice %56 {offsets = [0, 0], sizes = [4, 32], strides = [1, 1]} : vector<4x96xf32> to vector<4x32xf32>
    %60 = vector.extract_strided_slice %56 {offsets = [0, 32], sizes = [4, 32], strides = [1, 1]} : vector<4x96xf32> to vector<4x32xf32>
    %61 = vector.extract_strided_slice %56 {offsets = [0, 64], sizes = [4, 32], strides = [1, 1]} : vector<4x96xf32> to vector<4x32xf32>
    %62 = arith.mulf %60, %45 : vector<4x32xf32>
    %63 = arith.mulf %59, %58 : vector<4x32xf32>
    %64 = arith.addf %62, %63 : vector<4x32xf32>
    %65 = math.tanh %64 : vector<4x32xf32>
    %66 = arith.mulf %61, %65 : vector<4x32xf32>
    %67 = vector.extract_strided_slice %7 {offsets = [12, 0], sizes = [4, 128], strides = [1, 1]} : vector<32x128xf32> to vector<4x128xf32>
    %cst_16 = arith.constant dense<0.000000e+00> : vector<4x128xf32>
    %68 = tpu.matmul %66, %2, %cst_16 {dimension_numbers = #tpu.dot_dimension_numbers<[1], [0], [0], [1], [0, 0, 1, 1], [], []>} : vector<4x32xf32>, vector<32x128xf32>, vector<4x128xf32> -> vector<4x128xf32>
    %69 = arith.addf %67, %68 : vector<4x128xf32>
    %70 = vector.extract_strided_slice %69 {offsets = [0, 0], sizes = [4, 96], strides = [1, 1]} : vector<4x128xf32> to vector<4x96xf32>
    %71 = arith.negf %70 : vector<4x96xf32>
    %72 = math.exp %71 : vector<4x96xf32>
    %cst_17 = arith.constant 1.000000e+00 : f32
    %73 = vector.broadcast %cst_17 : f32 to vector<4x96xf32>
    %74 = arith.addf %73, %72 : vector<4x96xf32>
    %75 = arith.divf %73, %74 : vector<4x96xf32>
    %76 = vector.extract_strided_slice %69 {offsets = [0, 96], sizes = [4, 32], strides = [1, 1]} : vector<4x128xf32> to vector<4x32xf32>
    %77 = math.tanh %76 : vector<4x32xf32>
    %78 = vector.extract_strided_slice %75 {offsets = [0, 0], sizes = [4, 32], strides = [1, 1]} : vector<4x96xf32> to vector<4x32xf32>
    %79 = vector.extract_strided_slice %75 {offsets = [0, 32], sizes = [4, 32], strides = [1, 1]} : vector<4x96xf32> to vector<4x32xf32>
    %80 = vector.extract_strided_slice %75 {offsets = [0, 64], sizes = [4, 32], strides = [1, 1]} : vector<4x96xf32> to vector<4x32xf32>
    %81 = arith.mulf %79, %64 : vector<4x32xf32>
    %82 = arith.mulf %78, %77 : vector<4x32xf32>
    %83 = arith.addf %81, %82 : vector<4x32xf32>
    %84 = math.tanh %83 : vector<4x32xf32>
    %85 = arith.mulf %80, %84 : vector<4x32xf32>
    %86 = vector.extract_strided_slice %7 {offsets = [16, 0], sizes = [4, 128], strides = [1, 1]} : vector<32x128xf32> to vector<4x128xf32>
    %cst_18 = arith.constant dense<0.000000e+00> : vector<4x128xf32>
    %87 = tpu.matmul %85, %2, %cst_18 {dimension_numbers = #tpu.dot_dimension_numbers<[1], [0], [0], [1], [0, 0, 1, 1], [], []>} : vector<4x32xf32>, vector<32x128xf32>, vector<4x128xf32> -> vector<4x128xf32>
    %88 = arith.addf %86, %87 : vector<4x128xf32>
    %89 = vector.extract_strided_slice %88 {offsets = [0, 0], sizes = [4, 96], strides = [1, 1]} : vector<4x128xf32> to vector<4x96xf32>
    %90 = arith.negf %89 : vector<4x96xf32>
    %91 = math.exp %90 : vector<4x96xf32>
    %cst_19 = arith.constant 1.000000e+00 : f32
    %92 = vector.broadcast %cst_19 : f32 to vector<4x96xf32>
    %93 = arith.addf %92, %91 : vector<4x96xf32>
    %94 = arith.divf %92, %93 : vector<4x96xf32>
    %95 = vector.extract_strided_slice %88 {offsets = [0, 96], sizes = [4, 32], strides = [1, 1]} : vector<4x128xf32> to vector<4x32xf32>
    %96 = math.tanh %95 : vector<4x32xf32>
    %97 = vector.extract_strided_slice %94 {offsets = [0, 0], sizes = [4, 32], strides = [1, 1]} : vector<4x96xf32> to vector<4x32xf32>
    %98 = vector.extract_strided_slice %94 {offsets = [0, 32], sizes = [4, 32], strides = [1, 1]} : vector<4x96xf32> to vector<4x32xf32>
    %99 = vector.extract_strided_slice %94 {offsets = [0, 64], sizes = [4, 32], strides = [1, 1]} : vector<4x96xf32> to vector<4x32xf32>
    %100 = arith.mulf %98, %83 : vector<4x32xf32>
    %101 = arith.mulf %97, %96 : vector<4x32xf32>
    %102 = arith.addf %100, %101 : vector<4x32xf32>
    %103 = math.tanh %102 : vector<4x32xf32>
    %104 = arith.mulf %99, %103 : vector<4x32xf32>
    %105 = vector.extract_strided_slice %7 {offsets = [20, 0], sizes = [4, 128], strides = [1, 1]} : vector<32x128xf32> to vector<4x128xf32>
    %cst_20 = arith.constant dense<0.000000e+00> : vector<4x128xf32>
    %106 = tpu.matmul %104, %2, %cst_20 {dimension_numbers = #tpu.dot_dimension_numbers<[1], [0], [0], [1], [0, 0, 1, 1], [], []>} : vector<4x32xf32>, vector<32x128xf32>, vector<4x128xf32> -> vector<4x128xf32>
    %107 = arith.addf %105, %106 : vector<4x128xf32>
    %108 = vector.extract_strided_slice %107 {offsets = [0, 0], sizes = [4, 96], strides = [1, 1]} : vector<4x128xf32> to vector<4x96xf32>
    %109 = arith.negf %108 : vector<4x96xf32>
    %110 = math.exp %109 : vector<4x96xf32>
    %cst_21 = arith.constant 1.000000e+00 : f32
    %111 = vector.broadcast %cst_21 : f32 to vector<4x96xf32>
    %112 = arith.addf %111, %110 : vector<4x96xf32>
    %113 = arith.divf %111, %112 : vector<4x96xf32>
    %114 = vector.extract_strided_slice %107 {offsets = [0, 96], sizes = [4, 32], strides = [1, 1]} : vector<4x128xf32> to vector<4x32xf32>
    %115 = math.tanh %114 : vector<4x32xf32>
    %116 = vector.extract_strided_slice %113 {offsets = [0, 0], sizes = [4, 32], strides = [1, 1]} : vector<4x96xf32> to vector<4x32xf32>
    %117 = vector.extract_strided_slice %113 {offsets = [0, 32], sizes = [4, 32], strides = [1, 1]} : vector<4x96xf32> to vector<4x32xf32>
    %118 = vector.extract_strided_slice %113 {offsets = [0, 64], sizes = [4, 32], strides = [1, 1]} : vector<4x96xf32> to vector<4x32xf32>
    %119 = arith.mulf %117, %102 : vector<4x32xf32>
    %120 = arith.mulf %116, %115 : vector<4x32xf32>
    %121 = arith.addf %119, %120 : vector<4x32xf32>
    %122 = math.tanh %121 : vector<4x32xf32>
    %123 = arith.mulf %118, %122 : vector<4x32xf32>
    %124 = vector.extract_strided_slice %7 {offsets = [24, 0], sizes = [4, 128], strides = [1, 1]} : vector<32x128xf32> to vector<4x128xf32>
    %cst_22 = arith.constant dense<0.000000e+00> : vector<4x128xf32>
    %125 = tpu.matmul %123, %2, %cst_22 {dimension_numbers = #tpu.dot_dimension_numbers<[1], [0], [0], [1], [0, 0, 1, 1], [], []>} : vector<4x32xf32>, vector<32x128xf32>, vector<4x128xf32> -> vector<4x128xf32>
    %126 = arith.addf %124, %125 : vector<4x128xf32>
    %127 = vector.extract_strided_slice %126 {offsets = [0, 0], sizes = [4, 96], strides = [1, 1]} : vector<4x128xf32> to vector<4x96xf32>
    %128 = arith.negf %127 : vector<4x96xf32>
    %129 = math.exp %128 : vector<4x96xf32>
    %cst_23 = arith.constant 1.000000e+00 : f32
    %130 = vector.broadcast %cst_23 : f32 to vector<4x96xf32>
    %131 = arith.addf %130, %129 : vector<4x96xf32>
    %132 = arith.divf %130, %131 : vector<4x96xf32>
    %133 = vector.extract_strided_slice %126 {offsets = [0, 96], sizes = [4, 32], strides = [1, 1]} : vector<4x128xf32> to vector<4x32xf32>
    %134 = math.tanh %133 : vector<4x32xf32>
    %135 = vector.extract_strided_slice %132 {offsets = [0, 0], sizes = [4, 32], strides = [1, 1]} : vector<4x96xf32> to vector<4x32xf32>
    %136 = vector.extract_strided_slice %132 {offsets = [0, 32], sizes = [4, 32], strides = [1, 1]} : vector<4x96xf32> to vector<4x32xf32>
    %137 = vector.extract_strided_slice %132 {offsets = [0, 64], sizes = [4, 32], strides = [1, 1]} : vector<4x96xf32> to vector<4x32xf32>
    %138 = arith.mulf %136, %121 : vector<4x32xf32>
    %139 = arith.mulf %135, %134 : vector<4x32xf32>
    %140 = arith.addf %138, %139 : vector<4x32xf32>
    %141 = math.tanh %140 : vector<4x32xf32>
    %142 = arith.mulf %137, %141 : vector<4x32xf32>
    %143 = vector.extract_strided_slice %7 {offsets = [28, 0], sizes = [4, 128], strides = [1, 1]} : vector<32x128xf32> to vector<4x128xf32>
    %cst_24 = arith.constant dense<0.000000e+00> : vector<4x128xf32>
    %144 = tpu.matmul %142, %2, %cst_24 {dimension_numbers = #tpu.dot_dimension_numbers<[1], [0], [0], [1], [0, 0, 1, 1], [], []>} : vector<4x32xf32>, vector<32x128xf32>, vector<4x128xf32> -> vector<4x128xf32>
    %145 = arith.addf %143, %144 : vector<4x128xf32>
    %146 = vector.extract_strided_slice %145 {offsets = [0, 0], sizes = [4, 96], strides = [1, 1]} : vector<4x128xf32> to vector<4x96xf32>
    %147 = arith.negf %146 : vector<4x96xf32>
    %148 = math.exp %147 : vector<4x96xf32>
    %cst_25 = arith.constant 1.000000e+00 : f32
    %149 = vector.broadcast %cst_25 : f32 to vector<4x96xf32>
    %150 = arith.addf %149, %148 : vector<4x96xf32>
    %151 = arith.divf %149, %150 : vector<4x96xf32>
    %152 = vector.extract_strided_slice %145 {offsets = [0, 96], sizes = [4, 32], strides = [1, 1]} : vector<4x128xf32> to vector<4x32xf32>
    %153 = math.tanh %152 : vector<4x32xf32>
    %154 = vector.extract_strided_slice %151 {offsets = [0, 0], sizes = [4, 32], strides = [1, 1]} : vector<4x96xf32> to vector<4x32xf32>
    %155 = vector.extract_strided_slice %151 {offsets = [0, 32], sizes = [4, 32], strides = [1, 1]} : vector<4x96xf32> to vector<4x32xf32>
    %156 = vector.extract_strided_slice %151 {offsets = [0, 64], sizes = [4, 32], strides = [1, 1]} : vector<4x96xf32> to vector<4x32xf32>
    %157 = arith.mulf %155, %140 : vector<4x32xf32>
    %158 = arith.mulf %154, %153 : vector<4x32xf32>
    %159 = arith.addf %157, %158 : vector<4x32xf32>
    %160 = math.tanh %159 : vector<4x32xf32>
    %161 = arith.mulf %156, %160 : vector<4x32xf32>
    %162 = tpu.concatenate %28, %47, %66, %85, %104, %123, %142, %161 in 0 : vector<4x32xf32>, vector<4x32xf32>, vector<4x32xf32>, vector<4x32xf32>, vector<4x32xf32>, vector<4x32xf32>, vector<4x32xf32>, vector<4x32xf32> -> vector<32x32xf32>
    %c0_26 = arith.constant 0 : index
    %c0_27 = arith.constant 0 : index
    %163 = vector.load %arg5[%c0_26, %c0_27] : memref<32x128xf32, #tpu.memory_space<vmem>>, vector<32x128xf32>
    %cst_28 = arith.constant dense<0.000000e+00> : vector<32x128xf32>
    %164 = tpu.matmul %162, %163, %cst_28 {dimension_numbers = #tpu.dot_dimension_numbers<[1], [0], [0], [1], [0, 0, 1, 1], [], []>} : vector<32x32xf32>, vector<32x128xf32>, vector<32x128xf32> -> vector<32x128xf32>
    %c0_29 = arith.constant 0 : index
    %c0_30 = arith.constant 0 : index
    %165 = vector.load %arg6[%c0_29, %c0_30] : memref<1x128xf32, #tpu.memory_space<vmem>>, vector<1x128xf32>
    %166 = vector.broadcast %165 : vector<1x128xf32> to vector<32x128xf32>
    %167 = arith.addf %164, %166 : vector<32x128xf32>
    %168 = vector.shape_cast %167 : vector<32x128xf32> to vector<1x32x128xf32>
    %cst_31 = arith.constant dense<0.000000e+00> : vector<1xf32>
    %169 = vector.multi_reduction <add>, %168, %cst_31 [1, 2] : vector<1x32x128xf32> to vector<1xf32>
    %170 = vector.shape_cast %169 : vector<1xf32> to vector<1x1x1xf32>
    %171 = vector.extract %170[0, 0, 0] : f32 from vector<1x1x1xf32>
    %cst_32 = arith.constant 4.096000e+03 : f32
    %172 = arith.divf %171, %cst_32 : f32
    %173 = arith.mulf %167, %167 : vector<32x128xf32>
    %174 = vector.shape_cast %173 : vector<32x128xf32> to vector<1x32x128xf32>
    %cst_33 = arith.constant dense<0.000000e+00> : vector<1xf32>
    %175 = vector.multi_reduction <add>, %174, %cst_33 [1, 2] : vector<1x32x128xf32> to vector<1xf32>
    %176 = vector.shape_cast %175 : vector<1xf32> to vector<1x1x1xf32>
    %177 = vector.extract %176[0, 0, 0] : f32 from vector<1x1x1xf32>
    %cst_34 = arith.constant 4.096000e+03 : f32
    %178 = arith.divf %177, %cst_34 : f32
    %179 = arith.mulf %172, %172 : f32
    %180 = arith.subf %178, %179 : f32
    %cst_35 = arith.constant 0.000000e+00 : f32
    %181 = arith.maximumf %180, %cst_35 : f32
    %cst_36 = arith.constant 9.99999996E-13 : f32
    %182 = arith.addf %181, %cst_36 : f32
    %183 = math.rsqrt %182 : f32
    %184 = vector.broadcast %172 : f32 to vector<32x128xf32>
    %185 = arith.subf %167, %184 : vector<32x128xf32>
    %186 = vector.broadcast %183 : f32 to vector<32x128xf32>
    %187 = arith.mulf %185, %186 : vector<32x128xf32>
    %c0_37 = arith.constant 0 : index
    %c0_38 = arith.constant 0 : index
    %188 = vector.load %arg7[%c0_37, %c0_38] : memref<1x128xf32, #tpu.memory_space<vmem>>, vector<1x128xf32>
    %189 = vector.broadcast %188 : vector<1x128xf32> to vector<32x128xf32>
    %190 = arith.mulf %187, %189 : vector<32x128xf32>
    %c0_39 = arith.constant 0 : index
    %c0_40 = arith.constant 0 : index
    %191 = vector.load %arg8[%c0_39, %c0_40] : memref<1x128xf32, #tpu.memory_space<vmem>>, vector<1x128xf32>
    %192 = vector.broadcast %191 : vector<1x128xf32> to vector<32x128xf32>
    %193 = arith.addf %190, %192 : vector<32x128xf32>
    %194 = arith.addf %193, %1 : vector<32x128xf32>
    %c0_41 = arith.constant 0 : index
    %c0_42 = arith.constant 0 : index
    %c0_43 = arith.constant 0 : index
    %195 = vector.load %arg9[%c0_41, %c0_42, %c0_43] : memref<1x32x128xf32, #tpu.memory_space<vmem>>, vector<1x32x128xf32>
    %196 = vector.shape_cast %195 : vector<1x32x128xf32> to vector<32x128xf32>
    %197 = vector.shape_cast %194 : vector<32x128xf32> to vector<1x32x128xf32>
    tpu.vector_store %arg9[%c0_41, %c0_42, %c0_43], %197 {strides = array<i32>} : memref<1x32x128xf32, #tpu.memory_space<vmem>>, vector<1x32x128xf32>,
    return
  }
  func.func @transform_0(%arg0: i32) -> (i32, i32, i32) {
    %c0_i32 = arith.constant 0 : i32
    %c0_i32_0 = arith.constant 0 : i32
    %c0_i32_1 = arith.constant 0 : i32
    return %arg0, %c0_i32, %c0_i32_0 : i32, i32, i32
  }
  func.func @transform_1(%arg0: i32) -> (i32, i32) {
    %c0_i32 = arith.constant 0 : i32
    %c0_i32_0 = arith.constant 0 : i32
    %c0_i32_1 = arith.constant 0 : i32
    return %c0_i32, %c0_i32_0 : i32, i32
  }
  func.func @transform_2(%arg0: i32) -> (i32, i32) {
    %c0_i32 = arith.constant 0 : i32
    %c0_i32_0 = arith.constant 0 : i32
    %c0_i32_1 = arith.constant 0 : i32
    return %c0_i32, %c0_i32_0 : i32, i32
  }
  func.func @transform_3(%arg0: i32) -> (i32, i32) {
    %c0_i32 = arith.constant 0 : i32
    %c0_i32_0 = arith.constant 0 : i32
    %c0_i32_1 = arith.constant 0 : i32
    return %c0_i32, %c0_i32_0 : i32, i32
  }
  func.func @transform_4(%arg0: i32) -> (i32, i32) {
    %c0_i32 = arith.constant 0 : i32
    %c0_i32_0 = arith.constant 0 : i32
    %c0_i32_1 = arith.constant 0 : i32
    return %c0_i32, %c0_i32_0 : i32, i32
  }
  func.func @transform_5(%arg0: i32) -> (i32, i32) {
    %c0_i32 = arith.constant 0 : i32
    %c0_i32_0 = arith.constant 0 : i32
    %c0_i32_1 = arith.constant 0 : i32
    return %c0_i32, %c0_i32_0 : i32, i32
  }
  func.func @transform_6(%arg0: i32) -> (i32, i32) {
    %c0_i32 = arith.constant 0 : i32
    %c0_i32_0 = arith.constant 0 : i32
    %c0_i32_1 = arith.constant 0 : i32
    return %c0_i32, %c0_i32_0 : i32, i32
  }
  func.func @transform_7(%arg0: i32) -> (i32, i32) {
    %c0_i32 = arith.constant 0 : i32
    %c0_i32_0 = arith.constant 0 : i32
    %c0_i32_1 = arith.constant 0 : i32
    return %c0_i32, %c0_i32_0 : i32, i32
  }
  func.func @transform_8(%arg0: i32) -> (i32, i32, i32) {
    %c0_i32 = arith.constant 0 : i32
    %c0_i32_0 = arith.constant 0 : i32
    %c0_i32_1 = arith.constant 0 : i32
    return %arg0, %c0_i32, %c0_i32_0 : i32, i32, i32
  }
}

</mosaic_0001>

<llo_original>
// kernel: intra_chunk_rnn.1
$region0: #{intra_chunk_rnn.1}
  #allocation0 [shape = 'u32[]', space=smem, size = 0x4, offset = 0x4, fixed_abs, tag = 'smem constant byte address 0x4 - core index']
  #allocation1 [shape = 'u32[144,128]{1,0:T(1,128)}', space=vmem, size = 0x12000, scoped, tag = 'internal scratch']
  %s0 = inlined_call_operand.vmem [shape: f32[2,32,128], index: 0, kind: input, shape index: {}, may-alias: {0,8}]
  %s1 = inlined_call_operand.vmem [shape: f32[128,128], index: 1, kind: input, shape index: {}]
  %s2 = inlined_call_operand.vmem [shape: f32[32,128], index: 2, kind: input, shape index: {}]
  %s3 = inlined_call_operand.vmem [shape: f32[1,128], index: 3, kind: input, shape index: {}]
  %s4 = inlined_call_operand.vmem [shape: f32[32,128], index: 4, kind: input, shape index: {}]
  %s5 = inlined_call_operand.vmem [shape: f32[1,128], index: 5, kind: input, shape index: {}]
  %s6 = inlined_call_operand.vmem [shape: f32[1,128], index: 6, kind: input, shape index: {}]
  %s7 = inlined_call_operand.vmem [shape: f32[1,128], index: 7, kind: input, shape index: {}]
  %s8 = inlined_call_operand.vmem [shape: f32[2,32,128], index: 8, kind: output, shape index: {}, may-alias: {0,8}]
  %s9 = sld [smem:[#allocation0]]
  $region65: #{intra_chunk_rnn.1} parent=0
    _
  %s11 = ssub.s32 1, %s9
  %s12 = scalar_select 0, %s11, %s9
  loop: start=0, step=1, limit=4
  $region2: #{intra_chunk_rnn.1} parent=0 // loop_pre_header
    _
  $region3: #{intra_chunk_rnn.1} parent=0 // loop_header
    %s14 = sphi 0, %s18
    %p15 = scmp.ge.s32.totalorder %s14, 4
    %s24 = sphi 0, %s26
    %s27 = sphi 0, %s24
    %s28 = sphi 0, %s27
    %s44 = sphi 0, %s28
    %s48 = sphi 0, %s48
    %s50 = sphi 0, %s48
    %s51 = sphi 0, %s50
    %s65 = sphi 0, %s51
    %s69 = sphi 0, %s69
    %s71 = sphi 0, %s69
    %s72 = sphi 0, %s71
    %s86 = sphi 0, %s72
    %s90 = sphi 0, %s90
    %s92 = sphi 0, %s90
    %s93 = sphi 0, %s92
    %s107 = sphi 0, %s93
    %s111 = sphi 0, %s111
    %s113 = sphi 0, %s111
    %s114 = sphi 0, %s113
    %s128 = sphi 0, %s114
    %s132 = sphi 0, %s132
    %s134 = sphi 0, %s132
    %s135 = sphi 0, %s134
    %s149 = sphi 0, %s135
    %s153 = sphi 0, %s153
    %s155 = sphi 0, %s153
    %s156 = sphi 0, %s155
    %s170 = sphi 0, %s156
    %s174 = sphi 0, %s174
    %s176 = sphi 0, %s174
    %s177 = sphi 0, %s176
    %s191 = sphi 0, %s177
    %s197 = sphi 0, %s199
    %s200 = sphi 0, %s197
    %s201 = sphi 0, %s200
    %s217 = sphi 0, %s201
  $region4: #{intra_chunk_rnn.1} parent=0 // loop_header_branch
    %17 = sbr.rel (%p15) target = $region8
  $region5: #{intra_chunk_rnn.1} parent=0 // loop_body
    %s19 = ssub.s32 %s14, 1
    %s20 = ssub.s32 %s14, 2
    %s21 = sadd.s32 %s14, 1
    %s22 = ssub.s32 %s14, %s21
    %p23 = scmp.eq.s32.totalorder %s22, 0
    %s25 = sadd.s32 %s24, 1
    %s26 = scalar_select %p23, %s24, %s25
    %p29 = pneg %p23
    %p30 = scmp.eq.s32.totalorder %s14, 1
    %p31 = por %p29, %p30
    %p32 = scmp.ne.s32.totalorder %s24, %s27
    %p33 = scmp.eq.s32.totalorder %s14, 0
    %p34 = por %p32, %p33
    %p35 = scmp.ne.s32.totalorder %s24, %s27
    %p36 = scmp.eq.s32.totalorder %s19, 1
    %p37 = por %p35, %p36
    %p38 = scmp.ne.s32.totalorder %s27, %s28
    %p39 = scmp.eq.s32.totalorder %s19, 0
    %p40 = por %p38, %p39
    %p41 = scmp.ne.s32.totalorder %s27, %s28
    %p42 = scmp.eq.s32.totalorder %s20, 1
    %p43 = por %p41, %p42
    %p45 = scmp.ne.s32.totalorder %s28, %s44
    %p46 = scmp.eq.s32.totalorder %s20, 0
    %p47 = por %p45, %p46
    %s49 = sadd.s32 %s48, 1
    %p52 = scmp.eq.s32.totalorder %s14, 1
    %p53 = scmp.ne.s32.totalorder %s48, %s50
    %p54 = scmp.eq.s32.totalorder %s14, 0
    %p55 = por %p53, %p54
    %p56 = scmp.ne.s32.totalorder %s48, %s50
    %p57 = scmp.eq.s32.totalorder %s19, 1
    %p58 = por %p56, %p57
    %p59 = scmp.ne.s32.totalorder %s50, %s51
    %p60 = scmp.eq.s32.totalorder %s19, 0
    %p61 = por %p59, %p60
    %p62 = scmp.ne.s32.totalorder %s50, %s51
    %p63 = scmp.eq.s32.totalorder %s20, 1
    %p64 = por %p62, %p63
    %p66 = scmp.ne.s32.totalorder %s51, %s65
    %p67 = scmp.eq.s32.totalorder %s20, 0
    %p68 = por %p66, %p67
    %s70 = sadd.s32 %s69, 1
    %p73 = scmp.eq.s32.totalorder %s14, 1
    %p74 = scmp.ne.s32.totalorder %s69, %s71
    %p75 = scmp.eq.s32.totalorder %s14, 0
    %p76 = por %p74, %p75
    %p77 = scmp.ne.s32.totalorder %s69, %s71
    %p78 = scmp.eq.s32.totalorder %s19, 1
    %p79 = por %p77, %p78
    %p80 = scmp.ne.s32.totalorder %s71, %s72
    %p81 = scmp.eq.s32.totalorder %s19, 0
    %p82 = por %p80, %p81
    %p83 = scmp.ne.s32.totalorder %s71, %s72
    %p84 = scmp.eq.s32.totalorder %s20, 1
    %p85 = por %p83, %p84
    %p87 = scmp.ne.s32.totalorder %s72, %s86
    %p88 = scmp.eq.s32.totalorder %s20, 0
    %p89 = por %p87, %p88
    %s91 = sadd.s32 %s90, 1
    %p94 = scmp.eq.s32.totalorder %s14, 1
    %p95 = scmp.ne.s32.totalorder %s90, %s92
    %p96 = scmp.eq.s32.totalorder %s14, 0
    %p97 = por %p95, %p96
    %p98 = scmp.ne.s32.totalorder %s90, %s92
    %p99 = scmp.eq.s32.totalorder %s19, 1
    %p100 = por %p98, %p99
    %p101 = scmp.ne.s32.totalorder %s92, %s93
    %p102 = scmp.eq.s32.totalorder %s19, 0
    %p103 = por %p101, %p102
    %p104 = scmp.ne.s32.totalorder %s92, %s93
    %p105 = scmp.eq.s32.totalorder %s20, 1
    %p106 = por %p104, %p105
    %p108 = scmp.ne.s32.totalorder %s93, %s107
    %p109 = scmp.eq.s32.totalorder %s20, 0
    %p110 = por %p108, %p109
    %s112 = sadd.s32 %s111, 1
    %p115 = scmp.eq.s32.totalorder %s14, 1
    %p116 = scmp.ne.s32.totalorder %s111, %s113
    %p117 = scmp.eq.s32.totalorder %s14, 0
    %p118 = por %p116, %p117
    %p119 = scmp.ne.s32.totalorder %s111, %s113
    %p120 = scmp.eq.s32.totalorder %s19, 1
    %p121 = por %p119, %p120
    %p122 = scmp.ne.s32.totalorder %s113, %s114
    %p123 = scmp.eq.s32.totalorder %s19, 0
    %p124 = por %p122, %p123
    %p125 = scmp.ne.s32.totalorder %s113, %s114
    %p126 = scmp.eq.s32.totalorder %s20, 1
    %p127 = por %p125, %p126
    %p129 = scmp.ne.s32.totalorder %s114, %s128
    %p130 = scmp.eq.s32.totalorder %s20, 0
    %p131 = por %p129, %p130
    %s133 = sadd.s32 %s132, 1
    %p136 = scmp.eq.s32.totalorder %s14, 1
    %p137 = scmp.ne.s32.totalorder %s132, %s134
    %p138 = scmp.eq.s32.totalorder %s14, 0
    %p139 = por %p137, %p138
    %p140 = scmp.ne.s32.totalorder %s132, %s134
    %p141 = scmp.eq.s32.totalorder %s19, 1
    %p142 = por %p140, %p141
    %p143 = scmp.ne.s32.totalorder %s134, %s135
    %p144 = scmp.eq.s32.totalorder %s19, 0
    %p145 = por %p143, %p144
    %p146 = scmp.ne.s32.totalorder %s134, %s135
    %p147 = scmp.eq.s32.totalorder %s20, 1
    %p148 = por %p146, %p147
    %p150 = scmp.ne.s32.totalorder %s135, %s149
    %p151 = scmp.eq.s32.totalorder %s20, 0
    %p152 = por %p150, %p151
    %s154 = sadd.s32 %s153, 1
    %p157 = scmp.eq.s32.totalorder %s14, 1
    %p158 = scmp.ne.s32.totalorder %s153, %s155
    %p159 = scmp.eq.s32.totalorder %s14, 0
    %p160 = por %p158, %p159
    %p161 = scmp.ne.s32.totalorder %s153, %s155
    %p162 = scmp.eq.s32.totalorder %s19, 1
    %p163 = por %p161, %p162
    %p164 = scmp.ne.s32.totalorder %s155, %s156
    %p165 = scmp.eq.s32.totalorder %s19, 0
    %p166 = por %p164, %p165
    %p167 = scmp.ne.s32.totalorder %s155, %s156
    %p168 = scmp.eq.s32.totalorder %s20, 1
    %p169 = por %p167, %p168
    %p171 = scmp.ne.s32.totalorder %s156, %s170
    %p172 = scmp.eq.s32.totalorder %s20, 0
    %p173 = por %p171, %p172
    %s175 = sadd.s32 %s174, 1
    %p178 = scmp.eq.s32.totalorder %s14, 1
    %p179 = scmp.ne.s32.totalorder %s174, %s176
    %p180 = scmp.eq.s32.totalorder %s14, 0
    %p181 = por %p179, %p180
    %p182 = scmp.ne.s32.totalorder %s174, %s176
    %p183 = scmp.eq.s32.totalorder %s19, 1
    %p184 = por %p182, %p183
    %p185 = scmp.ne.s32.totalorder %s176, %s177
    %p186 = scmp.eq.s32.totalorder %s19, 0
    %p187 = por %p185, %p186
    %p188 = scmp.ne.s32.totalorder %s176, %s177
    %p189 = scmp.eq.s32.totalorder %s20, 1
    %p190 = por %p188, %p189
    %p192 = scmp.ne.s32.totalorder %s177, %s191
    %p193 = scmp.eq.s32.totalorder %s20, 0
    %p194 = por %p192, %p193
    %s195 = ssub.s32 %s14, %s21
    %p196 = scmp.eq.s32.totalorder %s195, 0
    %s198 = sadd.s32 %s197, 1
    %s199 = scalar_select %p196, %s197, %s198
    %p202 = pneg %p196
    %p203 = scmp.eq.s32.totalorder %s14, 1
    %p204 = por %p202, %p203
    %p205 = scmp.ne.s32.totalorder %s197, %s200
    %p206 = scmp.eq.s32.totalorder %s14, 0
    %p207 = por %p205, %p206
    %p208 = scmp.ne.s32.totalorder %s197, %s200
    %p209 = scmp.eq.s32.totalorder %s19, 1
    %p210 = por %p208, %p209
    %p211 = scmp.ne.s32.totalorder %s200, %s201
    %p212 = scmp.eq.s32.totalorder %s19, 0
    %p213 = por %p211, %p212
    %p214 = scmp.ne.s32.totalorder %s200, %s201
    %p215 = scmp.eq.s32.totalorder %s20, 1
    %p216 = por %p214, %p215
    %p218 = scmp.ne.s32.totalorder %s201, %s217
    %p219 = scmp.eq.s32.totalorder %s20, 0
    %p220 = por %p218, %p219
    %p221 = scmp.le.s32.totalorder 1, %s14
    %p222 = scmp.lt.s32.totalorder %s14, 3
    %p223 = pnand %p221, %p222
    %p224 = pneg %p223
    // Predicated region
    $region9: #{intra_chunk_rnn.1} parent=5 // pred_check
      _
    $region10: #{intra_chunk_rnn.1} parent=5 // pred_check_branch
      %226 = sbr.rel (%p223) target = $region12
    $region11: #{intra_chunk_rnn.1} parent=5 // pred_region
      %s227 = ssub.s32 %s14, 1
      // Predicated region
      $region13: #{intra_chunk_rnn.1} parent=11 // pred_check
        %p228 = pneg %p61
      $region14: #{intra_chunk_rnn.1} parent=11 // pred_check_branch
        %230 = sbr.rel (%p228) target = $region16
      $region15: #{intra_chunk_rnn.1} parent=11 // pred_region
        _
      $region16: #{intra_chunk_rnn.1} parent=11 // pred_fallthru
        _
      // Predicated region
      $region17: #{intra_chunk_rnn.1} parent=11 // pred_check
        %p231 = pneg %p82
      $region18: #{intra_chunk_rnn.1} parent=11 // pred_check_branch
        %233 = sbr.rel (%p231) target = $region20
      $region19: #{intra_chunk_rnn.1} parent=11 // pred_region
        _
      $region20: #{intra_chunk_rnn.1} parent=11 // pred_fallthru
        _
      // Predicated region
      $region21: #{intra_chunk_rnn.1} parent=11 // pred_check
        %p234 = pneg %p103
      $region22: #{intra_chunk_rnn.1} parent=11 // pred_check_branch
        %236 = sbr.rel (%p234) target = $region24
      $region23: #{intra_chunk_rnn.1} parent=11 // pred_region
        _
      $region24: #{intra_chunk_rnn.1} parent=11 // pred_fallthru
        _
      // Predicated region
      $region25: #{intra_chunk_rnn.1} parent=11 // pred_check
        %p237 = pneg %p124
      $region26: #{intra_chunk_rnn.1} parent=11 // pred_check_branch
        %239 = sbr.rel (%p237) target = $region28
      $region27: #{intra_chunk_rnn.1} parent=11 // pred_region
        _
      $region28: #{intra_chunk_rnn.1} parent=11 // pred_fallthru
        _
      // Predicated region
      $region29: #{intra_chunk_rnn.1} parent=11 // pred_check
        %p240 = pneg %p145
      $region30: #{intra_chunk_rnn.1} parent=11 // pred_check_branch
        %242 = sbr.rel (%p240) target = $region32
      $region31: #{intra_chunk_rnn.1} parent=11 // pred_region
        _
      $region32: #{intra_chunk_rnn.1} parent=11 // pred_fallthru
        _
      // Predicated region
      $region33: #{intra_chunk_rnn.1} parent=11 // pred_check
        %p243 = pneg %p166
      $region34: #{intra_chunk_rnn.1} parent=11 // pred_check_branch
        %245 = sbr.rel (%p243) target = $region36
      $region35: #{intra_chunk_rnn.1} parent=11 // pred_region
        _
      $region36: #{intra_chunk_rnn.1} parent=11 // pred_fallthru
        _
      // Predicated region
      $region37: #{intra_chunk_rnn.1} parent=11 // pred_check
        %p246 = pneg %p187
      $region38: #{intra_chunk_rnn.1} parent=11 // pred_check_branch
        %248 = sbr.rel (%p246) target = $region40
      $region39: #{intra_chunk_rnn.1} parent=11 // pred_region
        _
      $region40: #{intra_chunk_rnn.1} parent=11 // pred_fallthru
        _
    $region12: #{intra_chunk_rnn.1} parent=5 // pred_fallthru
      _
    %p249 = scmp.lt.s32.totalorder %s14, 2
    // Predicated region
    $region41: #{intra_chunk_rnn.1} parent=5 // pred_check
      %p250 = pneg %p249
    $region42: #{intra_chunk_rnn.1} parent=5 // pred_check_branch
      %252 = sbr.rel (%p250) target = $region44
    $region43: #{intra_chunk_rnn.1} parent=5 // pred_region
      // Predicated region
      $region45: #{intra_chunk_rnn.1} parent=43 // pred_check
        %p253 = pneg %p34
      $region46: #{intra_chunk_rnn.1} parent=43 // pred_check_branch
        %255 = sbr.rel (%p253) target = $region48
      $region47: #{intra_chunk_rnn.1} parent=43 // pred_region
        %p256 = scmp.lt.s32.totalorder %s14, 1
        %s257 = scalar_select %p256, %s14, 1
        %s258 = smul.addr %s257, 4
        %s259 = smul.addr %s258, 8
        %s260 = scalar_lea.vmem %s0, %s259
      $region48: #{intra_chunk_rnn.1} parent=43 // pred_fallthru
        _
    $region44: #{intra_chunk_rnn.1} parent=5 // pred_fallthru
      _
    %p261 = scmp.le.s32.totalorder 1, %s14
    %p262 = scmp.lt.s32.totalorder %s14, 3
    %p263 = pnand %p261, %p262
    %p264 = pneg %p263
    // Predicated region
    $region49: #{intra_chunk_rnn.1} parent=5 // pred_check
      _
    $region50: #{intra_chunk_rnn.1} parent=5 // pred_check_branch
      %266 = sbr.rel (%p263) target = $region52
    $region51: #{intra_chunk_rnn.1} parent=5 // pred_region
      %s267 = ssub.s32 %s14, 1
      %p268 = scmp.lt.s32.totalorder %s19, 1
      %s269 = scalar_select %p268, %s19, 1
      %s270 = smul.addr %s269, 4
      %s271 = smul.addr %s270, 8
      %s272 = scalar_lea.vmem %s0, %s271
      %p273 = pneg %p40
      %p274 = pneg %p37
      %p275 = pneg %p61
      %p276 = pneg %p58
      %p277 = pneg %p82
      %p278 = pneg %p79
      %p279 = pneg %p103
      %p280 = pneg %p100
      %p281 = pneg %p124
      %p282 = pneg %p121
      %p283 = pneg %p145
      %p284 = pneg %p142
      %p285 = pneg %p166
      %p286 = pneg %p163
      %p287 = pneg %p187
      %p288 = pneg %p184
      %p289 = pneg %p213
      %p290 = pneg %p210
      %p291 = scmp.lt.s32.totalorder %s19, 1
      %s292 = scalar_select %p291, %s19, 1
      %s293 = smul.addr %s292, 4
      %s294 = smul.addr %s293, 8
      %s295 = scalar_lea.vmem %s8, %s294
      %p296 = scmp.lt.s32.totalorder %s19, 1
      %s297 = scalar_select %p296, %s19, 1
      %s298 = smul.addr %s297, 4
      %s299 = smul.addr %s298, 8
      %s300 = scalar_lea.vmem %s0, %s299
      %p301 = scmp.lt.s32.totalorder %s19, 1
      %s302 = scalar_select %p301, %s19, 1
      %s303 = smul.addr %s302, 4
      %s304 = smul.addr %s303, 8
      %s305 = scalar_lea.vmem %s8, %s304
      %v306 = vld [vmem:[%s300] sm:$0xff]
      %v307 = vld [vmem:[%s300 + $0x8] sm:$0xff]
      %v308 = vld [vmem:[%s300 + $0x10] sm:$0xff]
      %v309 = vld [vmem:[%s300 + $0x18] sm:$0xff]
      %v310 = vld [vmem:[%s2] sm:$0xff]
      %v311 = vld [vmem:[%s2 + $0x8] sm:$0xff]
      %v312 = vld [vmem:[%s2 + $0x10] sm:$0xff]
      %v313 = vld [vmem:[%s2 + $0x18] sm:$0xff]
      %v314 = vld [vmem:[%s1] sm:$0xff]
      %v315 = vld [vmem:[%s1 + $0x8] sm:$0xff]
      %v316 = vld [vmem:[%s1 + $0x10] sm:$0xff]
      %v317 = vld [vmem:[%s1 + $0x18] sm:$0xff]
      %v318 = vld [vmem:[%s1 + $0x20] sm:$0xff]
      %v319 = vld [vmem:[%s1 + $0x28] sm:$0xff]
      %v320 = vld [vmem:[%s1 + $0x30] sm:$0xff]
      %v321 = vld [vmem:[%s1 + $0x38] sm:$0xff]
      %v322 = vld [vmem:[%s1 + $0x40] sm:$0xff]
      %v323 = vld [vmem:[%s1 + $0x48] sm:$0xff]
      %v324 = vld [vmem:[%s1 + $0x50] sm:$0xff]
      %v325 = vld [vmem:[%s1 + $0x58] sm:$0xff]
      %v326 = vld [vmem:[%s1 + $0x60] sm:$0xff]
      %v327 = vld [vmem:[%s1 + $0x68] sm:$0xff]
      %v328 = vld [vmem:[%s1 + $0x70] sm:$0xff]
      %v329 = vld [vmem:[%s1 + $0x78] sm:$0xff]
      %v330 = vld [vmem:[%s3] sm:$0x1]
      %v332 = vlaneseq
      %v333 = vshrl.u32 %v332, 7
      %v334 = vsub.s32 0, %v333
      %v335 = vrot.slane %v330, %v334
      %337 = vmatprep.subr.mxu0 0.0
      %338 = vmatpush1.msra.mxu0 %v314
      %339 = vmatprep.subr.mxu0 0.0
      %340 = vmatpush1.msra.mxu0 %v315
      %341 = vmatprep.subr.mxu0 0.0
      %342 = vmatpush1.msra.mxu0 %v316
      %343 = vmatprep.subr.mxu0 0.0
      %344 = vmatpush1.msra.mxu0 %v317
      %345 = vmatprep.subr.mxu0 0.0
      %346 = vmatpush1.msra.mxu0 %v318
      %347 = vmatprep.subr.mxu0 0.0
      %348 = vmatpush1.msra.mxu0 %v319
      %349 = vmatprep.subr.mxu0 0.0
      %350 = vmatpush1.msra.mxu0 %v320
      %351 = vmatprep.subr.mxu0 0.0
      %352 = vmatpush1.msra.mxu0 %v321
      %353 = vmatprep.subr.mxu0 0.0
      %354 = vmatpush1.msra.mxu0 %v322
      %355 = vmatprep.subr.mxu0 0.0
      %356 = vmatpush1.msra.mxu0 %v323
      %357 = vmatprep.subr.mxu0 0.0
      %358 = vmatpush1.msra.mxu0 %v324
      %359 = vmatprep.subr.mxu0 0.0
      %360 = vmatpush1.msra.mxu0 %v325
      %361 = vmatprep.subr.mxu0 0.0
      %362 = vmatpush1.msra.mxu0 %v326
      %363 = vmatprep.subr.mxu0 0.0
      %364 = vmatpush1.msra.mxu0 %v327
      %365 = vmatprep.subr.mxu0 0.0
      %366 = vmatpush1.msra.mxu0 %v328
      %367 = vmatprep.subr.mxu0 0.0
      %368 = vmatpush1.msra.mxu0 %v329
      %369 = vmatprep.subr.mxu0 0.0
      %370 = vmatpush1.msra.mxu0 0.0
      %371 = vmatprep.subr.mxu0 0.0
      %372 = vmatpush1.msra.mxu0 0.0
      %373 = vmatprep.subr.mxu0 0.0
      %374 = vmatpush1.msra.mxu0 0.0
      %375 = vmatprep.subr.mxu0 0.0
      %376 = vmatpush1.msra.mxu0 0.0
      %377 = vmatprep.subr.mxu0 0.0
      %378 = vmatpush1.msra.mxu0 0.0
      %379 = vmatprep.subr.mxu0 0.0
      %380 = vmatpush1.msra.mxu0 0.0
      %381 = vmatprep.subr.mxu0 0.0
      %382 = vmatpush1.msra.mxu0 0.0
      %383 = vmatprep.subr.mxu0 0.0
      %384 = vmatpush1.msra.mxu0 0.0
      %385 = vmatprep.subr.mxu0 0.0
      %386 = vmatpush1.msra.mxu0 0.0
      %387 = vmatprep.subr.mxu0 0.0
      %388 = vmatpush1.msra.mxu0 0.0
      %389 = vmatprep.subr.mxu0 0.0
      %390 = vmatpush1.msra.mxu0 0.0
      %391 = vmatprep.subr.mxu0 0.0
      %392 = vmatpush1.msra.mxu0 0.0
      %393 = vmatprep.subr.mxu0 0.0
      %394 = vmatpush1.msra.mxu0 0.0
      %395 = vmatprep.subr.mxu0 0.0
      %396 = vmatpush1.msra.mxu0 0.0
      %397 = vmatprep.subr.mxu0 0.0
      %398 = vmatpush1.msra.mxu0 0.0
      %399 = vmatprep.subr.mxu0 0.0
      %400 = vmatpush1.msra.mxu0 0.0
      %401 = vmatprep.mubr.f32.mxu0 0.0
      %402 = vmatmul.mubr.f32.gmra.mrb[0].mxu0 %v306
      %v403 = vpop.f32.mrb[0].mxu0
      %v404 = vadd.f32 %v335, %v403
      %v405 = vpop.f32.mrb[0].mxu0
      %406 = vmatprep.mubr.f32.mxu0 0.0
      %407 = vmatmul.mubr.f32.gmra.mrb[0].mxu0 %v307
      %v408 = vpop.f32.mrb[0].mxu0
      %v409 = vadd.f32 %v335, %v408
      %v410 = vpop.f32.mrb[0].mxu0
      %411 = vmatprep.mubr.f32.mxu0 0.0
      %412 = vmatmul.mubr.f32.gmra.mrb[0].mxu0 %v308
      %v413 = vpop.f32.mrb[0].mxu0
      %v414 = vadd.f32 %v335, %v413
      %v415 = vpop.f32.mrb[0].mxu0
      %416 = vmatprep.mubr.f32.mxu0 0.0
      %417 = vmatmul.mubr.f32.gmra.mrb[0].mxu0 %v309
      %v418 = vpop.f32.mrb[0].mxu0
      %v419 = vadd.f32 %v335, %v418
      %v420 = vpop.f32.mrb[0].mxu0
      %421 = vdwg.mxu0
      %vm422 = vcmask 261120
      %v424 = vsel %vm422, 0.0, 0
      %426 = vmatprep.subr.mxu0 0.0
      %427 = vmatpush1.msra.mxu0 %v310
      %428 = vmatprep.subr.mxu0 0.0
      %429 = vmatpush1.msra.mxu0 %v311
      %430 = vmatprep.subr.mxu0 0.0
      %431 = vmatpush1.msra.mxu0 %v312
      %432 = vmatprep.subr.mxu0 0.0
      %433 = vmatpush1.msra.mxu0 %v313
      %434 = vmatprep.subr.mxu0 0.0
      %435 = vmatpush1.msra.mxu0 0.0
      %436 = vmatprep.subr.mxu0 0.0
      %437 = vmatpush1.msra.mxu0 0.0
      %438 = vmatprep.subr.mxu0 0.0
      %439 = vmatpush1.msra.mxu0 0.0
      %440 = vmatprep.subr.mxu0 0.0
      %441 = vmatpush1.msra.mxu0 0.0
      %442 = vmatprep.subr.mxu0 0.0
      %443 = vmatpush1.msra.mxu0 0.0
      %444 = vmatprep.subr.mxu0 0.0
      %445 = vmatpush1.msra.mxu0 0.0
      %446 = vmatprep.subr.mxu0 0.0
      %447 = vmatpush1.msra.mxu0 0.0
      %448 = vmatprep.subr.mxu0 0.0
      %449 = vmatpush1.msra.mxu0 0.0
      %450 = vmatprep.subr.mxu0 0.0
      %451 = vmatpush1.msra.mxu0 0.0
      %452 = vmatprep.subr.mxu0 0.0
      %453 = vmatpush1.msra.mxu0 0.0
      %454 = vmatprep.subr.mxu0 0.0
      %455 = vmatpush1.msra.mxu0 0.0
      %456 = vmatprep.subr.mxu0 0.0
      %457 = vmatpush1.msra.mxu0 0.0
      %458 = vmatprep.subr.mxu0 0.0
      %459 = vmatpush1.msra.mxu0 0.0
      %460 = vmatprep.subr.mxu0 0.0
      %461 = vmatpush1.msra.mxu0 0.0
      %462 = vmatprep.subr.mxu0 0.0
      %463 = vmatpush1.msra.mxu0 0.0
      %464 = vmatprep.subr.mxu0 0.0
      %465 = vmatpush1.msra.mxu0 0.0
      %466 = vmatprep.subr.mxu0 0.0
      %467 = vmatpush1.msra.mxu0 0.0
      %468 = vmatprep.subr.mxu0 0.0
      %469 = vmatpush1.msra.mxu0 0.0
      %470 = vmatprep.subr.mxu0 0.0
      %471 = vmatpush1.msra.mxu0 0.0
      %472 = vmatprep.subr.mxu0 0.0
      %473 = vmatpush1.msra.mxu0 0.0
      %474 = vmatprep.subr.mxu0 0.0
      %475 = vmatpush1.msra.mxu0 0.0
      %476 = vmatprep.subr.mxu0 0.0
      %477 = vmatpush1.msra.mxu0 0.0
      %478 = vmatprep.subr.mxu0 0.0
      %479 = vmatpush1.msra.mxu0 0.0
      %480 = vmatprep.subr.mxu0 0.0
      %481 = vmatpush1.msra.mxu0 0.0
      %482 = vmatprep.subr.mxu0 0.0
      %483 = vmatpush1.msra.mxu0 0.0
      %484 = vmatprep.subr.mxu0 0.0
      %485 = vmatpush1.msra.mxu0 0.0
      %486 = vmatprep.subr.mxu0 0.0
      %487 = vmatpush1.msra.mxu0 0.0
      %488 = vmatprep.subr.mxu0 0.0
      %489 = vmatpush1.msra.mxu0 0.0
      %490 = vmatprep.mubr.f32.mxu0 0.0
      %491 = vmatmul.mubr.f32.gmra.mrb[0].mxu0 %v424
      %v492 = vpop.f32.mrb[0].mxu0
      %v493 = vadd.f32 0.0, %v492
      %v494 = vpop.f32.mrb[0].mxu0
      %495 = vdwg.mxu0
      %v496 = vadd.f32 %v404, %v493
      %v497 = vxor.u32 %v496, 2147483648
      %v498 = vmul.f32 %v497, 1.442695
      %v499 = vpow.pop %v498
      %v500 = vadd.f32 %v499, 1.0
      %v501 = vrcp.pop %v500
      %v502 = vmul.f32 1.0, %v501
      %v503 = vtanh.pop %v496
      %v504 = vmul.f32 %v502, 0.0
      %506 = vrot.lane.b32.xlu0 %v503, 32
      %v507 = vpop.permute.xlu0 %506
      %v509 = vmul.f32 %v502, %v507
      %511 = vrot.lane.b32.xlu0 %v509, 32
      %v512 = vpop.permute.xlu0 %511
      %v514 = vadd.f32 %v504, %v512
      %v515 = vtanh.pop %v514
      %517 = vrot.lane.b32.xlu0 %v515, 32
      %v518 = vpop.permute.xlu0 %517
      %v520 = vmul.f32 %v502, %v518
      %522 = vrot.lane.b32.xlu0 %v520, 64
      %v523 = vpop.permute.xlu0 %522
      %v524 = vsel %vm422, %v523, 0
      %526 = vmatprep.subr.mxu0 0.0
      %527 = vmatpush1.msra.mxu0 %v310
      %528 = vmatprep.subr.mxu0 0.0
      %529 = vmatpush1.msra.mxu0 %v311
      %530 = vmatprep.subr.mxu0 0.0
      %531 = vmatpush1.msra.mxu0 %v312
      %532 = vmatprep.subr.mxu0 0.0
      %533 = vmatpush1.msra.mxu0 %v313
      %534 = vmatprep.subr.mxu0 0.0
      %535 = vmatpush1.msra.mxu0 0.0
      %536 = vmatprep.subr.mxu0 0.0
      %537 = vmatpush1.msra.mxu0 0.0
      %538 = vmatprep.subr.mxu0 0.0
      %539 = vmatpush1.msra.mxu0 0.0
      %540 = vmatprep.subr.mxu0 0.0
      %541 = vmatpush1.msra.mxu0 0.0
      %542 = vmatprep.subr.mxu0 0.0
      %543 = vmatpush1.msra.mxu0 0.0
      %544 = vmatprep.subr.mxu0 0.0
      %545 = vmatpush1.msra.mxu0 0.0
      %546 = vmatprep.subr.mxu0 0.0
      %547 = vmatpush1.msra.mxu0 0.0
      %548 = vmatprep.subr.mxu0 0.0
      %549 = vmatpush1.msra.mxu0 0.0
      %550 = vmatprep.subr.mxu0 0.0
      %551 = vmatpush1.msra.mxu0 0.0
      %552 = vmatprep.subr.mxu0 0.0
      %553 = vmatpush1.msra.mxu0 0.0
      %554 = vmatprep.subr.mxu0 0.0
      %555 = vmatpush1.msra.mxu0 0.0
      %556 = vmatprep.subr.mxu0 0.0
      %557 = vmatpush1.msra.mxu0 0.0
      %558 = vmatprep.subr.mxu0 0.0
      %559 = vmatpush1.msra.mxu0 0.0
      %560 = vmatprep.subr.mxu0 0.0
      %561 = vmatpush1.msra.mxu0 0.0
      %562 = vmatprep.subr.mxu0 0.0
      %563 = vmatpush1.msra.mxu0 0.0
      %564 = vmatprep.subr.mxu0 0.0
      %565 = vmatpush1.msra.mxu0 0.0
      %566 = vmatprep.subr.mxu0 0.0
      %567 = vmatpush1.msra.mxu0 0.0
      %568 = vmatprep.subr.mxu0 0.0
      %569 = vmatpush1.msra.mxu0 0.0
      %570 = vmatprep.subr.mxu0 0.0
      %571 = vmatpush1.msra.mxu0 0.0
      %572 = vmatprep.subr.mxu0 0.0
      %573 = vmatpush1.msra.mxu0 0.0
      %574 = vmatprep.subr.mxu0 0.0
      %575 = vmatpush1.msra.mxu0 0.0
      %576 = vmatprep.subr.mxu0 0.0
      %577 = vmatpush1.msra.mxu0 0.0
      %578 = vmatprep.subr.mxu0 0.0
      %579 = vmatpush1.msra.mxu0 0.0
      %580 = vmatprep.subr.mxu0 0.0
      %581 = vmatpush1.msra.mxu0 0.0
      %582 = vmatprep.subr.mxu0 0.0
      %583 = vmatpush1.msra.mxu0 0.0
      %584 = vmatprep.subr.mxu0 0.0
      %585 = vmatpush1.msra.mxu0 0.0
      %586 = vmatprep.subr.mxu0 0.0
      %587 = vmatpush1.msra.mxu0 0.0
      %588 = vmatprep.subr.mxu0 0.0
      %589 = vmatpush1.msra.mxu0 0.0
      %590 = vmatprep.mubr.f32.mxu0 0.0
      %591 = vmatmul.mubr.f32.gmra.mrb[0].mxu0 %v524
      %v592 = vpop.f32.mrb[0].mxu0
      %v593 = vadd.f32 0.0, %v592
      %v594 = vpop.f32.mrb[0].mxu0
      %595 = vdwg.mxu0
      %v597 = vrot.slane %v593, 4
      %v599 = vadd.f32 %v404, %v597
      %v600 = vxor.u32 %v599, 2147483648
      %v601 = vmul.f32 %v600, 1.442695
      %v602 = vpow.pop %v601
      %v603 = vadd.f32 %v602, 1.0
      %v604 = vrcp.pop %v603
      %v605 = vmul.f32 1.0, %v604
      %v606 = vtanh.pop %v599
      %v608 = vrot.slane %v514, 4
      %v610 = vmul.f32 %v605, %v608
      %612 = vrot.lane.b32.xlu0 %v606, 32
      %v613 = vpop.permute.xlu0 %612
      %v615 = vmul.f32 %v605, %v613
      %617 = vrot.lane.b32.xlu0 %v615, 32
      %v618 = vpop.permute.xlu0 %617
      %v620 = vadd.f32 %v610, %v618
      %v621 = vtanh.pop %v620
      %623 = vrot.lane.b32.xlu0 %v621, 32
      %v624 = vpop.permute.xlu0 %623
      %v626 = vmul.f32 %v605, %v624
      %v628 = vrot.slane %v626, 4
      %629 = vrot.lane.b32.xlu0 %v628, 64
      %v630 = vpop.permute.xlu0 %629
      %v631 = vsel %vm422, %v630, 0
      %633 = vmatprep.subr.mxu0 0.0
      %634 = vmatpush1.msra.mxu0 %v310
      %635 = vmatprep.subr.mxu0 0.0
      %636 = vmatpush1.msra.mxu0 %v311
      %637 = vmatprep.subr.mxu0 0.0
      %638 = vmatpush1.msra.mxu0 %v312
      %639 = vmatprep.subr.mxu0 0.0
      %640 = vmatpush1.msra.mxu0 %v313
      %641 = vmatprep.subr.mxu0 0.0
      %642 = vmatpush1.msra.mxu0 0.0
      %643 = vmatprep.subr.mxu0 0.0
      %644 = vmatpush1.msra.mxu0 0.0
      %645 = vmatprep.subr.mxu0 0.0
      %646 = vmatpush1.msra.mxu0 0.0
      %647 = vmatprep.subr.mxu0 0.0
      %648 = vmatpush1.msra.mxu0 0.0
      %649 = vmatprep.subr.mxu0 0.0
      %650 = vmatpush1.msra.mxu0 0.0
      %651 = vmatprep.subr.mxu0 0.0
      %652 = vmatpush1.msra.mxu0 0.0
      %653 = vmatprep.subr.mxu0 0.0
      %654 = vmatpush1.msra.mxu0 0.0
      %655 = vmatprep.subr.mxu0 0.0
      %656 = vmatpush1.msra.mxu0 0.0
      %657 = vmatprep.subr.mxu0 0.0
      %658 = vmatpush1.msra.mxu0 0.0
      %659 = vmatprep.subr.mxu0 0.0
      %660 = vmatpush1.msra.mxu0 0.0
      %661 = vmatprep.subr.mxu0 0.0
      %662 = vmatpush1.msra.mxu0 0.0
      %663 = vmatprep.subr.mxu0 0.0
      %664 = vmatpush1.msra.mxu0 0.0
      %665 = vmatprep.subr.mxu0 0.0
      %666 = vmatpush1.msra.mxu0 0.0
      %667 = vmatprep.subr.mxu0 0.0
      %668 = vmatpush1.msra.mxu0 0.0
      %669 = vmatprep.subr.mxu0 0.0
      %670 = vmatpush1.msra.mxu0 0.0
      %671 = vmatprep.subr.mxu0 0.0
      %672 = vmatpush1.msra.mxu0 0.0
      %673 = vmatprep.subr.mxu0 0.0
      %674 = vmatpush1.msra.mxu0 0.0
      %675 = vmatprep.subr.mxu0 0.0
      %676 = vmatpush1.msra.mxu0 0.0
      %677 = vmatprep.subr.mxu0 0.0
      %678 = vmatpush1.msra.mxu0 0.0
      %679 = vmatprep.subr.mxu0 0.0
      %680 = vmatpush1.msra.mxu0 0.0
      %681 = vmatprep.subr.mxu0 0.0
      %682 = vmatpush1.msra.mxu0 0.0
      %683 = vmatprep.subr.mxu0 0.0
      %684 = vmatpush1.msra.mxu0 0.0
      %685 = vmatprep.subr.mxu0 0.0
      %686 = vmatpush1.msra.mxu0 0.0
      %687 = vmatprep.subr.mxu0 0.0
      %688 = vmatpush1.msra.mxu0 0.0
      %689 = vmatprep.subr.mxu0 0.0
      %690 = vmatpush1.msra.mxu0 0.0
      %691 = vmatprep.subr.mxu0 0.0
      %692 = vmatpush1.msra.mxu0 0.0
      %693 = vmatprep.subr.mxu0 0.0
      %694 = vmatpush1.msra.mxu0 0.0
      %695 = vmatprep.subr.mxu0 0.0
      %696 = vmatpush1.msra.mxu0 0.0
      %697 = vmatprep.mubr.f32.mxu0 0.0
      %698 = vmatmul.mubr.f32.gmra.mrb[0].mxu0 %v631
      %v699 = vpop.f32.mrb[0].mxu0
      %v700 = vadd.f32 0.0, %v699
      %v701 = vpop.f32.mrb[0].mxu0
      %702 = vdwg.mxu0
      %v703 = vadd.f32 %v409, %v700
      %v704 = vxor.u32 %v703, 2147483648
      %v705 = vmul.f32 %v704, 1.442695
      %v706 = vpow.pop %v705
      %v707 = vadd.f32 %v706, 1.0
      %v708 = vrcp.pop %v707
      %v709 = vmul.f32 1.0, %v708
      %v710 = vtanh.pop %v703
      %v712 = vrot.slane %v620, 4
      %v714 = vmul.f32 %v709, %v712
      %716 = vrot.lane.b32.xlu0 %v710, 32
      %v717 = vpop.permute.xlu0 %716
      %v719 = vmul.f32 %v709, %v717
      %721 = vrot.lane.b32.xlu0 %v719, 32
      %v722 = vpop.permute.xlu0 %721
      %v724 = vadd.f32 %v714, %v722
      %v725 = vtanh.pop %v724
      %727 = vrot.lane.b32.xlu0 %v725, 32
      %v728 = vpop.permute.xlu0 %727
      %v730 = vmul.f32 %v709, %v728
      %732 = vrot.lane.b32.xlu0 %v730, 64
      %v733 = vpop.permute.xlu0 %732
      %v734 = vsel %vm422, %v733, 0
      %736 = vmatprep.subr.mxu0 0.0
      %737 = vmatpush1.msra.mxu0 %v310
      %738 = vmatprep.subr.mxu0 0.0
      %739 = vmatpush1.msra.mxu0 %v311
      %740 = vmatprep.subr.mxu0 0.0
      %741 = vmatpush1.msra.mxu0 %v312
      %742 = vmatprep.subr.mxu0 0.0
      %743 = vmatpush1.msra.mxu0 %v313
      %744 = vmatprep.subr.mxu0 0.0
      %745 = vmatpush1.msra.mxu0 0.0
      %746 = vmatprep.subr.mxu0 0.0
      %747 = vmatpush1.msra.mxu0 0.0
      %748 = vmatprep.subr.mxu0 0.0
      %749 = vmatpush1.msra.mxu0 0.0
      %750 = vmatprep.subr.mxu0 0.0
      %751 = vmatpush1.msra.mxu0 0.0
      %752 = vmatprep.subr.mxu0 0.0
      %753 = vmatpush1.msra.mxu0 0.0
      %754 = vmatprep.subr.mxu0 0.0
      %755 = vmatpush1.msra.mxu0 0.0
      %756 = vmatprep.subr.mxu0 0.0
      %757 = vmatpush1.msra.mxu0 0.0
      %758 = vmatprep.subr.mxu0 0.0
      %759 = vmatpush1.msra.mxu0 0.0
      %760 = vmatprep.subr.mxu0 0.0
      %761 = vmatpush1.msra.mxu0 0.0
      %762 = vmatprep.subr.mxu0 0.0
      %763 = vmatpush1.msra.mxu0 0.0
      %764 = vmatprep.subr.mxu0 0.0
      %765 = vmatpush1.msra.mxu0 0.0
      %766 = vmatprep.subr.mxu0 0.0
      %767 = vmatpush1.msra.mxu0 0.0
      %768 = vmatprep.subr.mxu0 0.0
      %769 = vmatpush1.msra.mxu0 0.0
      %770 = vmatprep.subr.mxu0 0.0
      %771 = vmatpush1.msra.mxu0 0.0
      %772 = vmatprep.subr.mxu0 0.0
      %773 = vmatpush1.msra.mxu0 0.0
      %774 = vmatprep.subr.mxu0 0.0
      %775 = vmatpush1.msra.mxu0 0.0
      %776 = vmatprep.subr.mxu0 0.0
      %777 = vmatpush1.msra.mxu0 0.0
      %778 = vmatprep.subr.mxu0 0.0
      %779 = vmatpush1.msra.mxu0 0.0
      %780 = vmatprep.subr.mxu0 0.0
      %781 = vmatpush1.msra.mxu0 0.0
      %782 = vmatprep.subr.mxu0 0.0
      %783 = vmatpush1.msra.mxu0 0.0
      %784 = vmatprep.subr.mxu0 0.0
      %785 = vmatpush1.msra.mxu0 0.0
      %786 = vmatprep.subr.mxu0 0.0
      %787 = vmatpush1.msra.mxu0 0.0
      %788 = vmatprep.subr.mxu0 0.0
      %789 = vmatpush1.msra.mxu0 0.0
      %790 = vmatprep.subr.mxu0 0.0
      %791 = vmatpush1.msra.mxu0 0.0
      %792 = vmatprep.subr.mxu0 0.0
      %793 = vmatpush1.msra.mxu0 0.0
      %794 = vmatprep.subr.mxu0 0.0
      %795 = vmatpush1.msra.mxu0 0.0
      %796 = vmatprep.subr.mxu0 0.0
      %797 = vmatpush1.msra.mxu0 0.0
      %798 = vmatprep.subr.mxu0 0.0
      %799 = vmatpush1.msra.mxu0 0.0
      %800 = vmatprep.mubr.f32.mxu0 0.0
      %801 = vmatmul.mubr.f32.gmra.mrb[0].mxu0 %v734
      %v802 = vpop.f32.mrb[0].mxu0
      %v803 = vadd.f32 0.0, %v802
      %v804 = vpop.f32.mrb[0].mxu0
      %805 = vdwg.mxu0
      %v807 = vrot.slane %v803, 4
      %v809 = vadd.f32 %v409, %v807
      %v810 = vxor.u32 %v809, 2147483648
      %v811 = vmul.f32 %v810, 1.442695
      %v812 = vpow.pop %v811
      %v813 = vadd.f32 %v812, 1.0
      %v814 = vrcp.pop %v813
      %v815 = vmul.f32 1.0, %v814
      %v816 = vtanh.pop %v809
      %v818 = vrot.slane %v724, 4
      %v820 = vmul.f32 %v815, %v818
      %822 = vrot.lane.b32.xlu0 %v816, 32
      %v823 = vpop.permute.xlu0 %822
      %v825 = vmul.f32 %v815, %v823
      %827 = vrot.lane.b32.xlu0 %v825, 32
      %v828 = vpop.permute.xlu0 %827
      %v830 = vadd.f32 %v820, %v828
      %v831 = vtanh.pop %v830
      %833 = vrot.lane.b32.xlu0 %v831, 32
      %v834 = vpop.permute.xlu0 %833
      %v836 = vmul.f32 %v815, %v834
      %v838 = vrot.slane %v836, 4
      %839 = vrot.lane.b32.xlu0 %v838, 64
      %v840 = vpop.permute.xlu0 %839
      %v841 = vsel %vm422, %v840, 0
      %843 = vmatprep.subr.mxu0 0.0
      %844 = vmatpush1.msra.mxu0 %v310
      %845 = vmatprep.subr.mxu0 0.0
      %846 = vmatpush1.msra.mxu0 %v311
      %847 = vmatprep.subr.mxu0 0.0
      %848 = vmatpush1.msra.mxu0 %v312
      %849 = vmatprep.subr.mxu0 0.0
      %850 = vmatpush1.msra.mxu0 %v313
      %851 = vmatprep.subr.mxu0 0.0
      %852 = vmatpush1.msra.mxu0 0.0
      %853 = vmatprep.subr.mxu0 0.0
      %854 = vmatpush1.msra.mxu0 0.0
      %855 = vmatprep.subr.mxu0 0.0
      %856 = vmatpush1.msra.mxu0 0.0
      %857 = vmatprep.subr.mxu0 0.0
      %858 = vmatpush1.msra.mxu0 0.0
      %859 = vmatprep.subr.mxu0 0.0
      %860 = vmatpush1.msra.mxu0 0.0
      %861 = vmatprep.subr.mxu0 0.0
      %862 = vmatpush1.msra.mxu0 0.0
      %863 = vmatprep.subr.mxu0 0.0
      %864 = vmatpush1.msra.mxu0 0.0
      %865 = vmatprep.subr.mxu0 0.0
      %866 = vmatpush1.msra.mxu0 0.0
      %867 = vmatprep.subr.mxu0 0.0
      %868 = vmatpush1.msra.mxu0 0.0
      %869 = vmatprep.subr.mxu0 0.0
      %870 = vmatpush1.msra.mxu0 0.0
      %871 = vmatprep.subr.mxu0 0.0
      %872 = vmatpush1.msra.mxu0 0.0
      %873 = vmatprep.subr.mxu0 0.0
      %874 = vmatpush1.msra.mxu0 0.0
      %875 = vmatprep.subr.mxu0 0.0
      %876 = vmatpush1.msra.mxu0 0.0
      %877 = vmatprep.subr.mxu0 0.0
      %878 = vmatpush1.msra.mxu0 0.0
      %879 = vmatprep.subr.mxu0 0.0
      %880 = vmatpush1.msra.mxu0 0.0
      %881 = vmatprep.subr.mxu0 0.0
      %882 = vmatpush1.msra.mxu0 0.0
      %883 = vmatprep.subr.mxu0 0.0
      %884 = vmatpush1.msra.mxu0 0.0
      %885 = vmatprep.subr.mxu0 0.0
      %886 = vmatpush1.msra.mxu0 0.0
      %887 = vmatprep.subr.mxu0 0.0
      %888 = vmatpush1.msra.mxu0 0.0
      %889 = vmatprep.subr.mxu0 0.0
      %890 = vmatpush1.msra.mxu0 0.0
      %891 = vmatprep.subr.mxu0 0.0
      %892 = vmatpush1.msra.mxu0 0.0
      %893 = vmatprep.subr.mxu0 0.0
      %894 = vmatpush1.msra.mxu0 0.0
      %895 = vmatprep.subr.mxu0 0.0
      %896 = vmatpush1.msra.mxu0 0.0
      %897 = vmatprep.subr.mxu0 0.0
      %898 = vmatpush1.msra.mxu0 0.0
      %899 = vmatprep.subr.mxu0 0.0
      %900 = vmatpush1.msra.mxu0 0.0
      %901 = vmatprep.subr.mxu0 0.0
      %902 = vmatpush1.msra.mxu0 0.0
      %903 = vmatprep.subr.mxu0 0.0
      %904 = vmatpush1.msra.mxu0 0.0
      %905 = vmatprep.subr.mxu0 0.0
      %906 = vmatpush1.msra.mxu0 0.0
      %907 = vmatprep.mubr.f32.mxu0 0.0
      %908 = vmatmul.mubr.f32.gmra.mrb[0].mxu0 %v841
      %v909 = vpop.f32.mrb[0].mxu0
      %v910 = vadd.f32 0.0, %v909
      %v911 = vpop.f32.mrb[0].mxu0
      %912 = vdwg.mxu0
      %v913 = vadd.f32 %v414, %v910
      %v914 = vxor.u32 %v913, 2147483648
      %v915 = vmul.f32 %v914, 1.442695
      %v916 = vpow.pop %v915
      %v917 = vadd.f32 %v916, 1.0
      %v918 = vrcp.pop %v917
      %v919 = vmul.f32 1.0, %v918
      %v920 = vtanh.pop %v913
      %v922 = vrot.slane %v830, 4
      %v924 = vmul.f32 %v919, %v922
      %926 = vrot.lane.b32.xlu0 %v920, 32
      %v927 = vpop.permute.xlu0 %926
      %v929 = vmul.f32 %v919, %v927
      %931 = vrot.lane.b32.xlu0 %v929, 32
      %v932 = vpop.permute.xlu0 %931
      %v934 = vadd.f32 %v924, %v932
      %v935 = vtanh.pop %v934
      %937 = vrot.lane.b32.xlu0 %v935, 32
      %v938 = vpop.permute.xlu0 %937
      %v940 = vmul.f32 %v919, %v938
      %942 = vrot.lane.b32.xlu0 %v940, 64
      %v943 = vpop.permute.xlu0 %942
      %v944 = vsel %vm422, %v943, 0
      %946 = vmatprep.subr.mxu0 0.0
      %947 = vmatpush1.msra.mxu0 %v310
      %948 = vmatprep.subr.mxu0 0.0
      %949 = vmatpush1.msra.mxu0 %v311
      %950 = vmatprep.subr.mxu0 0.0
      %951 = vmatpush1.msra.mxu0 %v312
      %952 = vmatprep.subr.mxu0 0.0
      %953 = vmatpush1.msra.mxu0 %v313
      %954 = vmatprep.subr.mxu0 0.0
      %955 = vmatpush1.msra.mxu0 0.0
      %956 = vmatprep.subr.mxu0 0.0
      %957 = vmatpush1.msra.mxu0 0.0
      %958 = vmatprep.subr.mxu0 0.0
      %959 = vmatpush1.msra.mxu0 0.0
      %960 = vmatprep.subr.mxu0 0.0
      %961 = vmatpush1.msra.mxu0 0.0
      %962 = vmatprep.subr.mxu0 0.0
      %963 = vmatpush1.msra.mxu0 0.0
      %964 = vmatprep.subr.mxu0 0.0
      %965 = vmatpush1.msra.mxu0 0.0
      %966 = vmatprep.subr.mxu0 0.0
      %967 = vmatpush1.msra.mxu0 0.0
      %968 = vmatprep.subr.mxu0 0.0
      %969 = vmatpush1.msra.mxu0 0.0
      %970 = vmatprep.subr.mxu0 0.0
      %971 = vmatpush1.msra.mxu0 0.0
      %972 = vmatprep.subr.mxu0 0.0
      %973 = vmatpush1.msra.mxu0 0.0
      %974 = vmatprep.subr.mxu0 0.0
      %975 = vmatpush1.msra.mxu0 0.0
      %976 = vmatprep.subr.mxu0 0.0
      %977 = vmatpush1.msra.mxu0 0.0
      %978 = vmatprep.subr.mxu0 0.0
      %979 = vmatpush1.msra.mxu0 0.0
      %980 = vmatprep.subr.mxu0 0.0
      %981 = vmatpush1.msra.mxu0 0.0
      %982 = vmatprep.subr.mxu0 0.0
      %983 = vmatpush1.msra.mxu0 0.0
      %984 = vmatprep.subr.mxu0 0.0
      %985 = vmatpush1.msra.mxu0 0.0
      %986 = vmatprep.subr.mxu0 0.0
      %987 = vmatpush1.msra.mxu0 0.0
      %988 = vmatprep.subr.mxu0 0.0
      %989 = vmatpush1.msra.mxu0 0.0
      %990 = vmatprep.subr.mxu0 0.0
      %991 = vmatpush1.msra.mxu0 0.0
      %992 = vmatprep.subr.mxu0 0.0
      %993 = vmatpush1.msra.mxu0 0.0
      %994 = vmatprep.subr.mxu0 0.0
      %995 = vmatpush1.msra.mxu0 0.0
      %996 = vmatprep.subr.mxu0 0.0
      %997 = vmatpush1.msra.mxu0 0.0
      %998 = vmatprep.subr.mxu0 0.0
      %999 = vmatpush1.msra.mxu0 0.0
      %1000 = vmatprep.subr.mxu0 0.0
      %1001 = vmatpush1.msra.mxu0 0.0
      %1002 = vmatprep.subr.mxu0 0.0
      %1003 = vmatpush1.msra.mxu0 0.0
      %1004 = vmatprep.subr.mxu0 0.0
      %1005 = vmatpush1.msra.mxu0 0.0
      %1006 = vmatprep.subr.mxu0 0.0
      %1007 = vmatpush1.msra.mxu0 0.0
      %1008 = vmatprep.subr.mxu0 0.0
      %1009 = vmatpush1.msra.mxu0 0.0
      %1010 = vmatprep.mubr.f32.mxu0 0.0
      %1011 = vmatmul.mubr.f32.gmra.mrb[0].mxu0 %v944
      %v1012 = vpop.f32.mrb[0].mxu0
      %v1013 = vadd.f32 0.0, %v1012
      %v1014 = vpop.f32.mrb[0].mxu0
      %1015 = vdwg.mxu0
      %v1017 = vrot.slane %v1013, 4
      %v1019 = vadd.f32 %v414, %v1017
      %v1020 = vxor.u32 %v1019, 2147483648
      %v1021 = vmul.f32 %v1020, 1.442695
      %v1022 = vpow.pop %v1021
      %v1023 = vadd.f32 %v1022, 1.0
      %v1024 = vrcp.pop %v1023
      %v1025 = vmul.f32 1.0, %v1024
      %v1026 = vtanh.pop %v1019
      %v1028 = vrot.slane %v934, 4
      %v1030 = vmul.f32 %v1025, %v1028
      %1032 = vrot.lane.b32.xlu0 %v1026, 32
      %v1033 = vpop.permute.xlu0 %1032
      %v1035 = vmul.f32 %v1025, %v1033
      %1037 = vrot.lane.b32.xlu0 %v1035, 32
      %v1038 = vpop.permute.xlu0 %1037
      %v1040 = vadd.f32 %v1030, %v1038
      %v1041 = vtanh.pop %v1040
      %1043 = vrot.lane.b32.xlu0 %v1041, 32
      %v1044 = vpop.permute.xlu0 %1043
      %v1046 = vmul.f32 %v1025, %v1044
      %v1048 = vrot.slane %v1046, 4
      %1049 = vrot.lane.b32.xlu0 %v1048, 64
      %v1050 = vpop.permute.xlu0 %1049
      %v1051 = vsel %vm422, %v1050, 0
      %1053 = vmatprep.subr.mxu0 0.0
      %1054 = vmatpush1.msra.mxu0 %v310
      %1055 = vmatprep.subr.mxu0 0.0
      %1056 = vmatpush1.msra.mxu0 %v311
      %1057 = vmatprep.subr.mxu0 0.0
      %1058 = vmatpush1.msra.mxu0 %v312
      %1059 = vmatprep.subr.mxu0 0.0
      %1060 = vmatpush1.msra.mxu0 %v313
      %1061 = vmatprep.subr.mxu0 0.0
      %1062 = vmatpush1.msra.mxu0 0.0
      %1063 = vmatprep.subr.mxu0 0.0
      %1064 = vmatpush1.msra.mxu0 0.0
      %1065 = vmatprep.subr.mxu0 0.0
      %1066 = vmatpush1.msra.mxu0 0.0
      %1067 = vmatprep.subr.mxu0 0.0
      %1068 = vmatpush1.msra.mxu0 0.0
      %1069 = vmatprep.subr.mxu0 0.0
      %1070 = vmatpush1.msra.mxu0 0.0
      %1071 = vmatprep.subr.mxu0 0.0
      %1072 = vmatpush1.msra.mxu0 0.0
      %1073 = vmatprep.subr.mxu0 0.0
      %1074 = vmatpush1.msra.mxu0 0.0
      %1075 = vmatprep.subr.mxu0 0.0
      %1076 = vmatpush1.msra.mxu0 0.0
      %1077 = vmatprep.subr.mxu0 0.0
      %1078 = vmatpush1.msra.mxu0 0.0
      %1079 = vmatprep.subr.mxu0 0.0
      %1080 = vmatpush1.msra.mxu0 0.0
      %1081 = vmatprep.subr.mxu0 0.0
      %1082 = vmatpush1.msra.mxu0 0.0
      %1083 = vmatprep.subr.mxu0 0.0
      %1084 = vmatpush1.msra.mxu0 0.0
      %1085 = vmatprep.subr.mxu0 0.0
      %1086 = vmatpush1.msra.mxu0 0.0
      %1087 = vmatprep.subr.mxu0 0.0
      %1088 = vmatpush1.msra.mxu0 0.0
      %1089 = vmatprep.subr.mxu0 0.0
      %1090 = vmatpush1.msra.mxu0 0.0
      %1091 = vmatprep.subr.mxu0 0.0
      %1092 = vmatpush1.msra.mxu0 0.0
      %1093 = vmatprep.subr.mxu0 0.0
      %1094 = vmatpush1.msra.mxu0 0.0
      %1095 = vmatprep.subr.mxu0 0.0
      %1096 = vmatpush1.msra.mxu0 0.0
      %1097 = vmatprep.subr.mxu0 0.0
      %1098 = vmatpush1.msra.mxu0 0.0
      %1099 = vmatprep.subr.mxu0 0.0
      %1100 = vmatpush1.msra.mxu0 0.0
      %1101 = vmatprep.subr.mxu0 0.0
      %1102 = vmatpush1.msra.mxu0 0.0
      %1103 = vmatprep.subr.mxu0 0.0
      %1104 = vmatpush1.msra.mxu0 0.0
      %1105 = vmatprep.subr.mxu0 0.0
      %1106 = vmatpush1.msra.mxu0 0.0
      %1107 = vmatprep.subr.mxu0 0.0
      %1108 = vmatpush1.msra.mxu0 0.0
      %1109 = vmatprep.subr.mxu0 0.0
      %1110 = vmatpush1.msra.mxu0 0.0
      %1111 = vmatprep.subr.mxu0 0.0
      %1112 = vmatpush1.msra.mxu0 0.0
      %1113 = vmatprep.subr.mxu0 0.0
      %1114 = vmatpush1.msra.mxu0 0.0
      %1115 = vmatprep.subr.mxu0 0.0
      %1116 = vmatpush1.msra.mxu0 0.0
      %1117 = vmatprep.mubr.f32.mxu0 0.0
      %1118 = vmatmul.mubr.f32.gmra.mrb[0].mxu0 %v1051
      %v1119 = vpop.f32.mrb[0].mxu0
      %v1120 = vadd.f32 0.0, %v1119
      %v1121 = vpop.f32.mrb[0].mxu0
      %1122 = vdwg.mxu0
      %v1123 = vadd.f32 %v419, %v1120
      %v1124 = vxor.u32 %v1123, 2147483648
      %v1125 = vmul.f32 %v1124, 1.442695
      %v1126 = vpow.pop %v1125
      %v1127 = vadd.f32 %v1126, 1.0
      %v1128 = vrcp.pop %v1127
      %v1129 = vmul.f32 1.0, %v1128
      %v1130 = vtanh.pop %v1123
      %v1132 = vrot.slane %v1040, 4
      %v1134 = vmul.f32 %v1129, %v1132
      %1136 = vrot.lane.b32.xlu0 %v1130, 32
      %v1137 = vpop.permute.xlu0 %1136
      %v1139 = vmul.f32 %v1129, %v1137
      %1141 = vrot.lane.b32.xlu0 %v1139, 32
      %v1142 = vpop.permute.xlu0 %1141
      %v1144 = vadd.f32 %v1134, %v1142
      %v1145 = vtanh.pop %v1144
      %1147 = vrot.lane.b32.xlu0 %v1145, 32
      %v1148 = vpop.permute.xlu0 %1147
      %v1150 = vmul.f32 %v1129, %v1148
      %1152 = vrot.lane.b32.xlu0 %v1150, 64
      %v1153 = vpop.permute.xlu0 %1152
      %v1154 = vsel %vm422, %v1153, 0
      %1156 = vmatprep.subr.mxu0 0.0
      %1157 = vmatpush1.msra.mxu0 %v310
      %1158 = vmatprep.subr.mxu0 0.0
      %1159 = vmatpush1.msra.mxu0 %v311
      %1160 = vmatprep.subr.mxu0 0.0
      %1161 = vmatpush1.msra.mxu0 %v312
      %1162 = vmatprep.subr.mxu0 0.0
      %1163 = vmatpush1.msra.mxu0 %v313
      %1164 = vmatprep.subr.mxu0 0.0
      %1165 = vmatpush1.msra.mxu0 0.0
      %1166 = vmatprep.subr.mxu0 0.0
      %1167 = vmatpush1.msra.mxu0 0.0
      %1168 = vmatprep.subr.mxu0 0.0
      %1169 = vmatpush1.msra.mxu0 0.0
      %1170 = vmatprep.subr.mxu0 0.0
      %1171 = vmatpush1.msra.mxu0 0.0
      %1172 = vmatprep.subr.mxu0 0.0
      %1173 = vmatpush1.msra.mxu0 0.0
      %1174 = vmatprep.subr.mxu0 0.0
      %1175 = vmatpush1.msra.mxu0 0.0
      %1176 = vmatprep.subr.mxu0 0.0
      %1177 = vmatpush1.msra.mxu0 0.0
      %1178 = vmatprep.subr.mxu0 0.0
      %1179 = vmatpush1.msra.mxu0 0.0
      %1180 = vmatprep.subr.mxu0 0.0
      %1181 = vmatpush1.msra.mxu0 0.0
      %1182 = vmatprep.subr.mxu0 0.0
      %1183 = vmatpush1.msra.mxu0 0.0
      %1184 = vmatprep.subr.mxu0 0.0
      %1185 = vmatpush1.msra.mxu0 0.0
      %1186 = vmatprep.subr.mxu0 0.0
      %1187 = vmatpush1.msra.mxu0 0.0
      %1188 = vmatprep.subr.mxu0 0.0
      %1189 = vmatpush1.msra.mxu0 0.0
      %1190 = vmatprep.subr.mxu0 0.0
      %1191 = vmatpush1.msra.mxu0 0.0
      %1192 = vmatprep.subr.mxu0 0.0
      %1193 = vmatpush1.msra.mxu0 0.0
      %1194 = vmatprep.subr.mxu0 0.0
      %1195 = vmatpush1.msra.mxu0 0.0
      %1196 = vmatprep.subr.mxu0 0.0
      %1197 = vmatpush1.msra.mxu0 0.0
      %1198 = vmatprep.subr.mxu0 0.0
      %1199 = vmatpush1.msra.mxu0 0.0
      %1200 = vmatprep.subr.mxu0 0.0
      %1201 = vmatpush1.msra.mxu0 0.0
      %1202 = vmatprep.subr.mxu0 0.0
      %1203 = vmatpush1.msra.mxu0 0.0
      %1204 = vmatprep.subr.mxu0 0.0
      %1205 = vmatpush1.msra.mxu0 0.0
      %1206 = vmatprep.subr.mxu0 0.0
      %1207 = vmatpush1.msra.mxu0 0.0
      %1208 = vmatprep.subr.mxu0 0.0
      %1209 = vmatpush1.msra.mxu0 0.0
      %1210 = vmatprep.subr.mxu0 0.0
      %1211 = vmatpush1.msra.mxu0 0.0
      %1212 = vmatprep.subr.mxu0 0.0
      %1213 = vmatpush1.msra.mxu0 0.0
      %1214 = vmatprep.subr.mxu0 0.0
      %1215 = vmatpush1.msra.mxu0 0.0
      %1216 = vmatprep.subr.mxu0 0.0
      %1217 = vmatpush1.msra.mxu0 0.0
      %1218 = vmatprep.subr.mxu0 0.0
      %1219 = vmatpush1.msra.mxu0 0.0
      %1220 = vmatprep.mubr.f32.mxu0 0.0
      %1221 = vmatmul.mubr.f32.gmra.mrb[0].mxu0 %v1154
      %v1222 = vpop.f32.mrb[0].mxu0
      %v1223 = vadd.f32 0.0, %v1222
      %v1224 = vpop.f32.mrb[0].mxu0
      %1225 = vdwg.mxu0
      %v1227 = vrot.slane %v1223, 4
      %v1229 = vadd.f32 %v419, %v1227
      %v1230 = vxor.u32 %v1229, 2147483648
      %v1231 = vmul.f32 %v1230, 1.442695
      %v1232 = vpow.pop %v1231
      %v1233 = vadd.f32 %v1232, 1.0
      %v1234 = vrcp.pop %v1233
      %v1235 = vmul.f32 1.0, %v1234
      %v1236 = vtanh.pop %v1229
      %v1238 = vrot.slane %v1144, 4
      %v1240 = vmul.f32 %v1235, %v1238
      %1242 = vrot.lane.b32.xlu0 %v1236, 32
      %v1243 = vpop.permute.xlu0 %1242
      %v1245 = vmul.f32 %v1235, %v1243
      %1247 = vrot.lane.b32.xlu0 %v1245, 32
      %v1248 = vpop.permute.xlu0 %1247
      %v1250 = vadd.f32 %v1240, %v1248
      %v1251 = vtanh.pop %v1250
      %1253 = vrot.lane.b32.xlu0 %v1251, 32
      %v1254 = vpop.permute.xlu0 %1253
      %v1256 = vmul.f32 %v1235, %v1254
      %vm1257 = vcmask 1043456
      %v1258 = vsel %vm1257, %v520, %v626
      %v1259 = vsel %vm1257, %v730, %v836
      %v1260 = vsel %vm1257, %v940, %v1046
      %v1261 = vsel %vm1257, %v1150, %v1256
      %v1262 = vld [vmem:[%s4] sm:$0xff]
      %v1263 = vld [vmem:[%s4 + $0x8] sm:$0xff]
      %v1264 = vld [vmem:[%s4 + $0x10] sm:$0xff]
      %v1265 = vld [vmem:[%s4 + $0x18] sm:$0xff]
      %v1266 = vld [vmem:[%s5] sm:$0x1]
      %v1268 = vlaneseq
      %v1269 = vshrl.u32 %v1268, 7
      %v1270 = vsub.s32 0, %v1269
      %v1271 = vrot.slane %v1266, %v1270
      %1277 = vrot.lane.b32.xlu0 %v1258, 64
      %v1278 = vpop.permute.xlu0 %1277
      %1279 = vrot.lane.b32.xlu0 %v1259, 64
      %v1280 = vpop.permute.xlu0 %1279
      %1281 = vrot.lane.b32.xlu0 %v1260, 64
      %v1282 = vpop.permute.xlu0 %1281
      %1283 = vrot.lane.b32.xlu0 %v1261, 64
      %v1284 = vpop.permute.xlu0 %1283
      %v1285 = vsel %vm422, %v1278, 0
      %v1287 = vsel %vm422, %v1280, 0
      %v1289 = vsel %vm422, %v1282, 0
      %v1291 = vsel %vm422, %v1284, 0
      %1293 = vmatprep.subr.mxu0 0.0
      %1294 = vmatpush1.msra.mxu0 %v1262
      %1295 = vmatprep.subr.mxu0 0.0
      %1296 = vmatpush1.msra.mxu0 %v1263
      %1297 = vmatprep.subr.mxu0 0.0
      %1298 = vmatpush1.msra.mxu0 %v1264
      %1299 = vmatprep.subr.mxu0 0.0
      %1300 = vmatpush1.msra.mxu0 %v1265
      %1301 = vmatprep.subr.mxu0 0.0
      %1302 = vmatpush1.msra.mxu0 0.0
      %1303 = vmatprep.subr.mxu0 0.0
      %1304 = vmatpush1.msra.mxu0 0.0
      %1305 = vmatprep.subr.mxu0 0.0
      %1306 = vmatpush1.msra.mxu0 0.0
      %1307 = vmatprep.subr.mxu0 0.0
      %1308 = vmatpush1.msra.mxu0 0.0
      %1309 = vmatprep.subr.mxu0 0.0
      %1310 = vmatpush1.msra.mxu0 0.0
      %1311 = vmatprep.subr.mxu0 0.0
      %1312 = vmatpush1.msra.mxu0 0.0
      %1313 = vmatprep.subr.mxu0 0.0
      %1314 = vmatpush1.msra.mxu0 0.0
      %1315 = vmatprep.subr.mxu0 0.0
      %1316 = vmatpush1.msra.mxu0 0.0
      %1317 = vmatprep.subr.mxu0 0.0
      %1318 = vmatpush1.msra.mxu0 0.0
      %1319 = vmatprep.subr.mxu0 0.0
      %1320 = vmatpush1.msra.mxu0 0.0
      %1321 = vmatprep.subr.mxu0 0.0
      %1322 = vmatpush1.msra.mxu0 0.0
      %1323 = vmatprep.subr.mxu0 0.0
      %1324 = vmatpush1.msra.mxu0 0.0
      %1325 = vmatprep.subr.mxu0 0.0
      %1326 = vmatpush1.msra.mxu0 0.0
      %1327 = vmatprep.subr.mxu0 0.0
      %1328 = vmatpush1.msra.mxu0 0.0
      %1329 = vmatprep.subr.mxu0 0.0
      %1330 = vmatpush1.msra.mxu0 0.0
      %1331 = vmatprep.subr.mxu0 0.0
      %1332 = vmatpush1.msra.mxu0 0.0
      %1333 = vmatprep.subr.mxu0 0.0
      %1334 = vmatpush1.msra.mxu0 0.0
      %1335 = vmatprep.subr.mxu0 0.0
      %1336 = vmatpush1.msra.mxu0 0.0
      %1337 = vmatprep.subr.mxu0 0.0
      %1338 = vmatpush1.msra.mxu0 0.0
      %1339 = vmatprep.subr.mxu0 0.0
      %1340 = vmatpush1.msra.mxu0 0.0
      %1341 = vmatprep.subr.mxu0 0.0
      %1342 = vmatpush1.msra.mxu0 0.0
      %1343 = vmatprep.subr.mxu0 0.0
      %1344 = vmatpush1.msra.mxu0 0.0
      %1345 = vmatprep.subr.mxu0 0.0
      %1346 = vmatpush1.msra.mxu0 0.0
      %1347 = vmatprep.subr.mxu0 0.0
      %1348 = vmatpush1.msra.mxu0 0.0
      %1349 = vmatprep.subr.mxu0 0.0
      %1350 = vmatpush1.msra.mxu0 0.0
      %1351 = vmatprep.subr.mxu0 0.0
      %1352 = vmatpush1.msra.mxu0 0.0
      %1353 = vmatprep.subr.mxu0 0.0
      %1354 = vmatpush1.msra.mxu0 0.0
      %1355 = vmatprep.subr.mxu0 0.0
      %1356 = vmatpush1.msra.mxu0 0.0
      %1357 = vmatprep.mubr.f32.mxu0 0.0
      %1358 = vmatmul.mubr.f32.gmra.mrb[0].mxu0 %v1285
      %v1359 = vpop.f32.mrb[0].mxu0
      %v1360 = vadd.f32 %v1271, %v1359
      %v1361 = vpop.f32.mrb[0].mxu0
      %1362 = vmatprep.mubr.f32.mxu0 0.0
      %1363 = vmatmul.mubr.f32.gmra.mrb[0].mxu0 %v1287
      %v1364 = vpop.f32.mrb[0].mxu0
      %v1365 = vadd.f32 %v1271, %v1364
      %v1366 = vpop.f32.mrb[0].mxu0
      %1367 = vmatprep.mubr.f32.mxu0 0.0
      %1368 = vmatmul.mubr.f32.gmra.mrb[0].mxu0 %v1289
      %v1369 = vpop.f32.mrb[0].mxu0
      %v1370 = vadd.f32 %v1271, %v1369
      %v1371 = vpop.f32.mrb[0].mxu0
      %1372 = vmatprep.mubr.f32.mxu0 0.0
      %1373 = vmatmul.mubr.f32.gmra.mrb[0].mxu0 %v1291
      %v1374 = vpop.f32.mrb[0].mxu0
      %v1375 = vadd.f32 %v1271, %v1374
      %v1376 = vpop.f32.mrb[0].mxu0
      %1377 = vdwg.mxu0
      %v1378 = vadd.f32 %v1360, %v1365
      %v1379 = vadd.f32 %v1378, %v1370
      %v1380 = vadd.f32 %v1379, %v1375
      %1381 = vadd.xlane.f32.xlu0 %v1380
      %v1382 = vpop.xlane.xlu0 %1381
      %v1383 = vrot.slane %v1382, 4
      %v1384 = vadd.f32 %v1382, %v1383
      %v1385 = vrot.slane %v1384, 2
      %v1386 = vadd.f32 %v1384, %v1385
      %v1387 = vrot.slane %v1386, 1
      %v1388 = vadd.f32 %v1386, %v1387
      %s1389 = vtos %v1388
      %v1390 = vrcp.pop 4096.0
      %s1391 = vtos %v1390
      %s1392 = smul.f32 %s1389, %s1391
      %v1393 = vmul.f32 %v1360, %v1360
      %v1394 = vmul.f32 %v1365, %v1365
      %v1395 = vmul.f32 %v1370, %v1370
      %v1396 = vmul.f32 %v1375, %v1375
      %v1397 = vadd.f32 %v1393, %v1394
      %v1398 = vadd.f32 %v1397, %v1395
      %v1399 = vadd.f32 %v1398, %v1396
      %1400 = vadd.xlane.f32.xlu0 %v1399
      %v1401 = vpop.xlane.xlu0 %1400
      %v1402 = vrot.slane %v1401, 4
      %v1403 = vadd.f32 %v1401, %v1402
      %v1404 = vrot.slane %v1403, 2
      %v1405 = vadd.f32 %v1403, %v1404
      %v1406 = vrot.slane %v1405, 1
      %v1407 = vadd.f32 %v1405, %v1406
      %s1408 = vtos %v1407
      %v1409 = vrcp.pop 4096.0
      %s1410 = vtos %v1409
      %s1411 = smul.f32 %s1408, %s1410
      %s1412 = smul.f32 %s1392, %s1392
      %s1413 = ssub.f32 %s1411, %s1412
      %s1414 = smax.f32 %s1413, 0.0
      %s1415 = sadd.f32 %s1414, 1e-12
      %v1416 = vstv %s1415
      %v1417 = vrsqrt.pop %v1416
      %s1418 = vtos %v1417
      %v1419 = vstv %s1392
      %v1420 = vsub.f32 %v1360, %v1419
      %v1421 = vsub.f32 %v1365, %v1419
      %v1422 = vsub.f32 %v1370, %v1419
      %v1423 = vsub.f32 %v1375, %v1419
      %v1424 = vstv %s1418
      %v1425 = vmul.f32 %v1420, %v1424
      %v1426 = vmul.f32 %v1421, %v1424
      %v1427 = vmul.f32 %v1422, %v1424
      %v1428 = vmul.f32 %v1423, %v1424
      %v1429 = vld [vmem:[%s6] sm:$0x1]
      %v1431 = vlaneseq
      %v1432 = vshrl.u32 %v1431, 7
      %v1433 = vsub.s32 0, %v1432
      %v1434 = vrot.slane %v1429, %v1433
      %v1436 = vmul.f32 %v1425, %v1434
      %v1437 = vmul.f32 %v1426, %v1434
      %v1438 = vmul.f32 %v1427, %v1434
      %v1439 = vmul.f32 %v1428, %v1434
      %v1440 = vld [vmem:[%s7] sm:$0x1]
      %v1442 = vlaneseq
      %v1443 = vshrl.u32 %v1442, 7
      %v1444 = vsub.s32 0, %v1443
      %v1445 = vrot.slane %v1440, %v1444
      %v1447 = vadd.f32 %v1436, %v1445
      %v1448 = vadd.f32 %v1437, %v1445
      %v1449 = vadd.f32 %v1438, %v1445
      %v1450 = vadd.f32 %v1439, %v1445
      %v1451 = vadd.f32 %v1447, %v306
      %v1452 = vadd.f32 %v1448, %v307
      %v1453 = vadd.f32 %v1449, %v308
      %v1454 = vadd.f32 %v1450, %v309
      %1455 = vst [vmem:[%s305] sm:$0xff] %v1451
      %1456 = vst [vmem:[%s305 + $0x8] sm:$0xff] %v1452
      %1457 = vst [vmem:[%s305 + $0x10] sm:$0xff] %v1453
      %1458 = vst [vmem:[%s305 + $0x18] sm:$0xff] %v1454
      %p1459 = scmp.lt.s32.totalorder %s19, 1
      %s1460 = scalar_select %p1459, %s19, 1
      %s1461 = smul.addr %s1460, 4
      %s1462 = smul.addr %s1461, 8
      %s1463 = scalar_lea.vmem %s8, %s1462
      // Predicated region
      $region53: #{intra_chunk_rnn.1} parent=51 // pred_check
        %p1464 = pneg %p210
      $region54: #{intra_chunk_rnn.1} parent=51 // pred_check_branch
        %1466 = sbr.rel (%p1464) target = $region56
      $region55: #{intra_chunk_rnn.1} parent=51 // pred_region
        _
      $region56: #{intra_chunk_rnn.1} parent=51 // pred_fallthru
        _
    $region52: #{intra_chunk_rnn.1} parent=5 // pred_fallthru
      _
    %p1467 = scmp.le.s32.totalorder 2, %s14
    // Predicated region
    $region57: #{intra_chunk_rnn.1} parent=5 // pred_check
      %p1468 = pneg %p1467
    $region58: #{intra_chunk_rnn.1} parent=5 // pred_check_branch
      %1470 = sbr.rel (%p1468) target = $region60
    $region59: #{intra_chunk_rnn.1} parent=5 // pred_region
      %s1471 = ssub.s32 %s14, 2
      // Predicated region
      $region61: #{intra_chunk_rnn.1} parent=59 // pred_check
        %p1472 = pneg %p216
      $region62: #{intra_chunk_rnn.1} parent=59 // pred_check_branch
        %1474 = sbr.rel (%p1472) target = $region64
      $region63: #{intra_chunk_rnn.1} parent=59 // pred_region
        %p1475 = scmp.lt.s32.totalorder %s20, 1
        %s1476 = scalar_select %p1475, %s20, 1
        %s1477 = smul.addr %s1476, 4
        %s1478 = smul.addr %s1477, 8
        %s1479 = scalar_lea.vmem %s8, %s1478
      $region64: #{intra_chunk_rnn.1} parent=59 // pred_fallthru
        _
    $region60: #{intra_chunk_rnn.1} parent=5 // pred_fallthru
      _
  $region6: #{intra_chunk_rnn.1} parent=0 // loop_footer
    %s18 = sadd.s32 1, %s14
  $region7: #{intra_chunk_rnn.1} parent=0 // loop_footer_branch
    %13 = sbr.rel target = $region3
  $region8: #{intra_chunk_rnn.1} parent=0 // loop_exit
    _

</llo_original>
